<compile_context>
chip_gen: v7x
topology: tpu7x:2x2x1
jax: 0.10.0
libtpu: 0.0.40
codegen_flags: <defaults>
</compile_context>

<pallas_src>
import numpy as np

import jax
import jax.numpy as jnp
from jax.experimental import pallas as pl
from jax.experimental.pallas import tpu as pltpu


PADDING_TYPE = "reflect"   # 'reflect' | 'replicate' | 'zero'


# ------------------------------------------------------------------
# Fully fused ResnetBlock kernel: one grid step = one batch element.
# ------------------------------------------------------------------
def _resnet_block_kernel(x_ref, s_ref, w1_ref, b1_ref, w2_ref, b2_ref, o_ref):
    x = x_ref[0]                                            # (C, HW) f32, lane-dense

    def conv3x3(h, w_ref, b_ref):
        # 9 padded spatial shifts as selection matmuls (MXU), then one
        # (C, 9C) @ (9C, HW) weight matmul. No reshapes / relayouts.
        patches = jnp.concatenate(
            [jnp.dot(h, s_ref[t], preferred_element_type=jnp.float32)
             for t in range(9)],
            axis=0)                                         # (9C, HW)
        return jnp.dot(w_ref[...], patches,
                       preferred_element_type=jnp.float32) + b_ref[...]

    def instance_norm(y):                                   # affine=False, eps=1e-5
        inv_hw = 1.0 / y.shape[1]
        m = jnp.sum(y, axis=1, keepdims=True) * inv_hw      # single pass:
        v = jnp.sum(y * y, axis=1, keepdims=True) * inv_hw - m * m
        v = jnp.maximum(v, 0.0)
        return (y - m) * jax.lax.rsqrt(v + 1e-5)            # rsqrt -> EUP

    h = jnp.maximum(instance_norm(conv3x3(x, w1_ref, b1_ref)), 0.0)   # ReLU
    # TODO(synk): nn.Dropout(0.5) path (use_dropout=True) not exercised in this config.
    y = instance_norm(conv3x3(h, w2_ref, b2_ref))
    o_ref[0] = (x + y).astype(o_ref.dtype)                  # residual connection


@jax.jit
def resnet_block_forward(x_nchw, prepared, shift_mats):
    N, C, H, W = x_nchw.shape
    HW = H * W
    x_flat = x_nchw.reshape(N, C, HW)                       # NCHW -> (N, C, HW), free

    out = pl.pallas_call(
        _resnet_block_kernel,
        out_shape=jax.ShapeDtypeStruct((N, C, HW), jnp.float32),
        grid=(N,),
        in_specs=[
            pl.BlockSpec((1, C, HW), lambda n: (n, 0, 0)),          # x (per batch)
            pl.BlockSpec((9, HW, HW), lambda n: (0, 0, 0)),         # shift/pad matrices
            pl.BlockSpec((C, 9 * C), lambda n: (0, 0)),             # w1 (prepacked)
            pl.BlockSpec((C, 1), lambda n: (0, 0)),                 # b1
            pl.BlockSpec((C, 9 * C), lambda n: (0, 0)),             # w2 (prepacked)
            pl.BlockSpec((C, 1), lambda n: (0, 0)),                 # b2
        ],
        out_specs=pl.BlockSpec((1, C, HW), lambda n: (n, 0, 0)),
        compiler_params=pltpu.CompilerParams(
            dimension_semantics=("parallel",)),                     # v7x: one TC per batch elem
    )(x_flat, shift_mats, prepared["w1m"], prepared["b1"],
      prepared["w2m"], prepared["b2"])
    return out.reshape(N, C, H, W)


# ------------------------------------------------------------------
# One-time host-side preparation (hoisted out of the jitted forward).
# ------------------------------------------------------------------
def build_shift_matrices(H, W, padding_type="reflect"):
    """S[t, src, dst] = 1 iff tap t of output pixel dst reads input pixel src
    (with pad=1 boundary handling of the given padding type)."""
    def map_idx(i, n):
        if 0 <= i < n:
            return i
        if padding_type == "reflect":
            return -i if i < 0 else 2 * n - 2 - i
        if padding_type == "replicate":
            return min(max(i, 0), n - 1)
        return None  # zero padding: out-of-range taps contribute 0

    mats = np.zeros((9, H * W, H * W), np.float32)
    for t, (kh, kw) in enumerate((a, b) for a in range(3) for b in range(3)):
        for i in range(H):
            si = map_idx(i + kh - 1, H)
            if si is None:
                continue
            for j in range(W):
                sj = map_idx(j + kw - 1, W)
                if sj is None:
                    continue
                mats[t, si * W + sj, i * W + j] = 1.0
    return jnp.asarray(mats)


def prepare_params(params, C):
    """Repack (O,I,3,3) conv weights as (O, 9*I) with column index t*I + i,
    t = kh*3 + kw, matching the in-kernel patch layout; biases as (C,1)."""
    def mat(w):
        return jnp.transpose(w, (0, 2, 3, 1)).reshape(C, 9 * C)
    return {
        "w1m": mat(params["w1"]), "b1": params["b1"].reshape(C, 1),
        "w2m": mat(params["w2"]), "b2": params["b2"].reshape(C, 1),
    }


# ------------------------------------------------------------------
# Pure-JAX reference (independent path) for correctness checking.
# ------------------------------------------------------------------
def resnet_block_ref(x, params, padding_type="reflect"):
    def conv3x3(h, w, b):
        if padding_type == "reflect":
            hp = jnp.pad(h, ((0, 0), (0, 0), (1, 1), (1, 1)), mode="reflect")
        elif padding_type == "replicate":
            hp = jnp.pad(h, ((0, 0), (0, 0), (1, 1), (1, 1)), mode="edge")
        else:
            hp = jnp.pad(h, ((0, 0), (0, 0), (1, 1), (1, 1)))
        y = jax.lax.conv_general_dilated(
            hp, w, (1, 1), "VALID", dimension_numbers=("NCHW", "OIHW", "NCHW"))
        return y + b[None, :, None, None]

    def inorm(y):
        m = jnp.mean(y, axis=(2, 3), keepdims=True)
        v = jnp.mean((y - m) ** 2, axis=(2, 3), keepdims=True)
        return (y - m) * jax.lax.rsqrt(v + 1e-5)

    h = jax.nn.relu(inorm(conv3x3(x, params["w1"], params["b1"])))
    h = inorm(conv3x3(h, params["w2"], params["b2"]))
    return x + h


# ------------------------------------------------------------------
# Deterministic synthetic setup
# ------------------------------------------------------------------
if __name__ == "__main__":
    key = jax.random.PRNGKey(0)
    kx, kw1, kb1, kw2, kb2 = jax.random.split(key, 5)

    N, DIM, H, W = 2, 8, 16, 16
    params = {
        "w1": 0.05 * jax.random.normal(kw1, (DIM, DIM, 3, 3), jnp.float32),
        "b1": 0.05 * jax.random.normal(kb1, (DIM,), jnp.float32),
        "w2": 0.05 * jax.random.normal(kw2, (DIM, DIM, 3, 3), jnp.float32),
        "b2": 0.05 * jax.random.normal(kb2, (DIM,), jnp.float32),
    }
    prepared = prepare_params(params, DIM)
    shift_mats = build_shift_matrices(H, W, PADDING_TYPE)

    x = jax.random.normal(kx, (N, DIM, H, W), jnp.float32)   # NCHW, like PyTorch

    out = resnet_block_forward(x, prepared, shift_mats)
    out = jax.block_until_ready(out)

    assert out.shape == (N, DIM, H, W), out.shape
    assert out.dtype == jnp.float32
    assert bool(jnp.all(jnp.isfinite(out)))

    ref = resnet_block_ref(x, params, PADDING_TYPE)
    max_err = float(jnp.max(jnp.abs(out - ref)))
    assert max_err < 1e-1, f"max abs err vs reference: {max_err}"

    print("KERNEL_OK")
</pallas_src>

<mosaic_0001>
module attributes {stable_mosaic.version = 11 : i64} {
  func.func @_resnet_block_kernel(%arg0: i32, %arg1: memref<1x8x256xf32, #tpu.memory_space<vmem>>, %arg2: memref<9x256x256xf32, #tpu.memory_space<vmem>>, %arg3: memref<8x72xf32, #tpu.memory_space<vmem>>, %arg4: memref<8x1xf32, #tpu.memory_space<vmem>>, %arg5: memref<8x72xf32, #tpu.memory_space<vmem>>, %arg6: memref<8x1xf32, #tpu.memory_space<vmem>>, %arg7: memref<1x8x256xf32, #tpu.memory_space<vmem>>) attributes {dimension_semantics = [#tpu.dimension_semantics<parallel>], iteration_bounds = array<i64: 2>, scalar_prefetch = 0 : i64, scratch_operands = 0 : i64, tpu.core_type = #tpu.core_type<tc>, window_params = [{transform_indices = @transform_0, window_bounds = array<i64: 1, 8, 256>}, {pipeline_mode = #tpu.pipeline_mode<synchronous>, transform_indices = @transform_1, window_bounds = array<i64: 9, 256, 256>}, {pipeline_mode = #tpu.pipeline_mode<synchronous>, transform_indices = @transform_2, window_bounds = array<i64: 8, 72>}, {pipeline_mode = #tpu.pipeline_mode<synchronous>, transform_indices = @transform_3, window_bounds = array<i64: 8, 1>}, {pipeline_mode = #tpu.pipeline_mode<synchronous>, transform_indices = @transform_4, window_bounds = array<i64: 8, 72>}, {pipeline_mode = #tpu.pipeline_mode<synchronous>, transform_indices = @transform_5, window_bounds = array<i64: 8, 1>}, {transform_indices = @transform_6, window_bounds = array<i64: 1, 8, 256>}]} {
    %c0 = arith.constant 0 : index
    %c0_0 = arith.constant 0 : index
    %c0_1 = arith.constant 0 : index
    %0 = vector.load %arg1[%c0, %c0_0, %c0_1] : memref<1x8x256xf32, #tpu.memory_space<vmem>>, vector<1x8x256xf32>
    %1 = vector.shape_cast %0 : vector<1x8x256xf32> to vector<8x256xf32>
    %c0_2 = arith.constant 0 : index
    %c0_3 = arith.constant 0 : index
    %c0_4 = arith.constant 0 : index
    %2 = vector.load %arg2[%c0_2, %c0_3, %c0_4] : memref<9x256x256xf32, #tpu.memory_space<vmem>>, vector<1x256x256xf32>
    %3 = vector.shape_cast %2 : vector<1x256x256xf32> to vector<256x256xf32>
    %cst = arith.constant dense<0.000000e+00> : vector<8x256xf32>
    %4 = tpu.matmul %1, %3, %cst {dimension_numbers = #tpu.dot_dimension_numbers<[1], [0], [0], [1], [0, 0, 1, 1], [], []>} : vector<8x256xf32>, vector<256x256xf32>, vector<8x256xf32> -> vector<8x256xf32>
    %c1 = arith.constant 1 : index
    %c0_5 = arith.constant 0 : index
    %c0_6 = arith.constant 0 : index
    %5 = vector.load %arg2[%c1, %c0_5, %c0_6] : memref<9x256x256xf32, #tpu.memory_space<vmem>>, vector<1x256x256xf32>
    %6 = vector.shape_cast %5 : vector<1x256x256xf32> to vector<256x256xf32>
    %cst_7 = arith.constant dense<0.000000e+00> : vector<8x256xf32>
    %7 = tpu.matmul %1, %6, %cst_7 {dimension_numbers = #tpu.dot_dimension_numbers<[1], [0], [0], [1], [0, 0, 1, 1], [], []>} : vector<8x256xf32>, vector<256x256xf32>, vector<8x256xf32> -> vector<8x256xf32>
    %c2 = arith.constant 2 : index
    %c0_8 = arith.constant 0 : index
    %c0_9 = arith.constant 0 : index
    %8 = vector.load %arg2[%c2, %c0_8, %c0_9] : memref<9x256x256xf32, #tpu.memory_space<vmem>>, vector<1x256x256xf32>
    %9 = vector.shape_cast %8 : vector<1x256x256xf32> to vector<256x256xf32>
    %cst_10 = arith.constant dense<0.000000e+00> : vector<8x256xf32>
    %10 = tpu.matmul %1, %9, %cst_10 {dimension_numbers = #tpu.dot_dimension_numbers<[1], [0], [0], [1], [0, 0, 1, 1], [], []>} : vector<8x256xf32>, vector<256x256xf32>, vector<8x256xf32> -> vector<8x256xf32>
    %c3 = arith.constant 3 : index
    %c0_11 = arith.constant 0 : index
    %c0_12 = arith.constant 0 : index
    %11 = vector.load %arg2[%c3, %c0_11, %c0_12] : memref<9x256x256xf32, #tpu.memory_space<vmem>>, vector<1x256x256xf32>
    %12 = vector.shape_cast %11 : vector<1x256x256xf32> to vector<256x256xf32>
    %cst_13 = arith.constant dense<0.000000e+00> : vector<8x256xf32>
    %13 = tpu.matmul %1, %12, %cst_13 {dimension_numbers = #tpu.dot_dimension_numbers<[1], [0], [0], [1], [0, 0, 1, 1], [], []>} : vector<8x256xf32>, vector<256x256xf32>, vector<8x256xf32> -> vector<8x256xf32>
    %c4 = arith.constant 4 : index
    %c0_14 = arith.constant 0 : index
    %c0_15 = arith.constant 0 : index
    %14 = vector.load %arg2[%c4, %c0_14, %c0_15] : memref<9x256x256xf32, #tpu.memory_space<vmem>>, vector<1x256x256xf32>
    %15 = vector.shape_cast %14 : vector<1x256x256xf32> to vector<256x256xf32>
    %cst_16 = arith.constant dense<0.000000e+00> : vector<8x256xf32>
    %16 = tpu.matmul %1, %15, %cst_16 {dimension_numbers = #tpu.dot_dimension_numbers<[1], [0], [0], [1], [0, 0, 1, 1], [], []>} : vector<8x256xf32>, vector<256x256xf32>, vector<8x256xf32> -> vector<8x256xf32>
    %c5 = arith.constant 5 : index
    %c0_17 = arith.constant 0 : index
    %c0_18 = arith.constant 0 : index
    %17 = vector.load %arg2[%c5, %c0_17, %c0_18] : memref<9x256x256xf32, #tpu.memory_space<vmem>>, vector<1x256x256xf32>
    %18 = vector.shape_cast %17 : vector<1x256x256xf32> to vector<256x256xf32>
    %cst_19 = arith.constant dense<0.000000e+00> : vector<8x256xf32>
    %19 = tpu.matmul %1, %18, %cst_19 {dimension_numbers = #tpu.dot_dimension_numbers<[1], [0], [0], [1], [0, 0, 1, 1], [], []>} : vector<8x256xf32>, vector<256x256xf32>, vector<8x256xf32> -> vector<8x256xf32>
    %c6 = arith.constant 6 : index
    %c0_20 = arith.constant 0 : index
    %c0_21 = arith.constant 0 : index
    %20 = vector.load %arg2[%c6, %c0_20, %c0_21] : memref<9x256x256xf32, #tpu.memory_space<vmem>>, vector<1x256x256xf32>
    %21 = vector.shape_cast %20 : vector<1x256x256xf32> to vector<256x256xf32>
    %cst_22 = arith.constant dense<0.000000e+00> : vector<8x256xf32>
    %22 = tpu.matmul %1, %21, %cst_22 {dimension_numbers = #tpu.dot_dimension_numbers<[1], [0], [0], [1], [0, 0, 1, 1], [], []>} : vector<8x256xf32>, vector<256x256xf32>, vector<8x256xf32> -> vector<8x256xf32>
    %c7 = arith.constant 7 : index
    %c0_23 = arith.constant 0 : index
    %c0_24 = arith.constant 0 : index
    %23 = vector.load %arg2[%c7, %c0_23, %c0_24] : memref<9x256x256xf32, #tpu.memory_space<vmem>>, vector<1x256x256xf32>
    %24 = vector.shape_cast %23 : vector<1x256x256xf32> to vector<256x256xf32>
    %cst_25 = arith.constant dense<0.000000e+00> : vector<8x256xf32>
    %25 = tpu.matmul %1, %24, %cst_25 {dimension_numbers = #tpu.dot_dimension_numbers<[1], [0], [0], [1], [0, 0, 1, 1], [], []>} : vector<8x256xf32>, vector<256x256xf32>, vector<8x256xf32> -> vector<8x256xf32>
    %c8 = arith.constant 8 : index
    %c0_26 = arith.constant 0 : index
    %c0_27 = arith.constant 0 : index
    %26 = vector.load %arg2[%c8, %c0_26, %c0_27] : memref<9x256x256xf32, #tpu.memory_space<vmem>>, vector<1x256x256xf32>
    %27 = vector.shape_cast %26 : vector<1x256x256xf32> to vector<256x256xf32>
    %cst_28 = arith.constant dense<0.000000e+00> : vector<8x256xf32>
    %28 = tpu.matmul %1, %27, %cst_28 {dimension_numbers = #tpu.dot_dimension_numbers<[1], [0], [0], [1], [0, 0, 1, 1], [], []>} : vector<8x256xf32>, vector<256x256xf32>, vector<8x256xf32> -> vector<8x256xf32>
    %29 = tpu.concatenate %4, %7, %10, %13, %16, %19, %22, %25, %28 in 0 : vector<8x256xf32>, vector<8x256xf32>, vector<8x256xf32>, vector<8x256xf32>, vector<8x256xf32>, vector<8x256xf32>, vector<8x256xf32>, vector<8x256xf32>, vector<8x256xf32> -> vector<72x256xf32>
    %c0_29 = arith.constant 0 : index
    %c0_30 = arith.constant 0 : index
    %30 = vector.load %arg3[%c0_29, %c0_30] : memref<8x72xf32, #tpu.memory_space<vmem>>, vector<8x72xf32>
    %cst_31 = arith.constant dense<0.000000e+00> : vector<8x256xf32>
    %31 = tpu.matmul %30, %29, %cst_31 {dimension_numbers = #tpu.dot_dimension_numbers<[1], [0], [0], [1], [0, 0, 1, 1], [], []>} : vector<8x72xf32>, vector<72x256xf32>, vector<8x256xf32> -> vector<8x256xf32>
    %c0_32 = arith.constant 0 : index
    %c0_33 = arith.constant 0 : index
    %32 = vector.load %arg4[%c0_32, %c0_33] : memref<8x1xf32, #tpu.memory_space<vmem>>, vector<8x1xf32>
    %33 = vector.broadcast %32 : vector<8x1xf32> to vector<8x256xf32>
    %34 = arith.addf %31, %33 : vector<8x256xf32>
    %cst_34 = arith.constant dense<0.000000e+00> : vector<8xf32>
    %35 = vector.multi_reduction <add>, %34, %cst_34 [1] : vector<8x256xf32> to vector<8xf32>
    %36 = vector.shape_cast %35 : vector<8xf32> to vector<8x1xf32>
    %cst_35 = arith.constant 3.906250e-03 : f32
    %37 = vector.broadcast %cst_35 : f32 to vector<8x1xf32>
    %38 = arith.mulf %36, %37 : vector<8x1xf32>
    %39 = arith.mulf %34, %34 : vector<8x256xf32>
    %cst_36 = arith.constant dense<0.000000e+00> : vector<8xf32>
    %40 = vector.multi_reduction <add>, %39, %cst_36 [1] : vector<8x256xf32> to vector<8xf32>
    %41 = vector.shape_cast %40 : vector<8xf32> to vector<8x1xf32>
    %cst_37 = arith.constant 3.906250e-03 : f32
    %42 = vector.broadcast %cst_37 : f32 to vector<8x1xf32>
    %43 = arith.mulf %41, %42 : vector<8x1xf32>
    %44 = arith.mulf %38, %38 : vector<8x1xf32>
    %45 = arith.subf %43, %44 : vector<8x1xf32>
    %cst_38 = arith.constant 0.000000e+00 : f32
    %46 = vector.broadcast %cst_38 : f32 to vector<8x1xf32>
    %47 = arith.maximumf %45, %46 : vector<8x1xf32>
    %48 = vector.broadcast %38 : vector<8x1xf32> to vector<8x256xf32>
    %49 = arith.subf %34, %48 : vector<8x256xf32>
    %cst_39 = arith.constant 9.99999974E-6 : f32
    %50 = vector.broadcast %cst_39 : f32 to vector<8x1xf32>
    %51 = arith.addf %47, %50 : vector<8x1xf32>
    %52 = math.rsqrt %51 : vector<8x1xf32>
    %53 = vector.broadcast %52 : vector<8x1xf32> to vector<8x256xf32>
    %54 = arith.mulf %49, %53 : vector<8x256xf32>
    %cst_40 = arith.constant 0.000000e+00 : f32
    %55 = vector.broadcast %cst_40 : f32 to vector<8x256xf32>
    %56 = arith.maximumf %54, %55 : vector<8x256xf32>
    %c0_41 = arith.constant 0 : index
    %c0_42 = arith.constant 0 : index
    %c0_43 = arith.constant 0 : index
    %57 = vector.load %arg2[%c0_41, %c0_42, %c0_43] : memref<9x256x256xf32, #tpu.memory_space<vmem>>, vector<1x256x256xf32>
    %58 = vector.shape_cast %57 : vector<1x256x256xf32> to vector<256x256xf32>
    %cst_44 = arith.constant dense<0.000000e+00> : vector<8x256xf32>
    %59 = tpu.matmul %56, %58, %cst_44 {dimension_numbers = #tpu.dot_dimension_numbers<[1], [0], [0], [1], [0, 0, 1, 1], [], []>} : vector<8x256xf32>, vector<256x256xf32>, vector<8x256xf32> -> vector<8x256xf32>
    %c1_45 = arith.constant 1 : index
    %c0_46 = arith.constant 0 : index
    %c0_47 = arith.constant 0 : index
    %60 = vector.load %arg2[%c1_45, %c0_46, %c0_47] : memref<9x256x256xf32, #tpu.memory_space<vmem>>, vector<1x256x256xf32>
    %61 = vector.shape_cast %60 : vector<1x256x256xf32> to vector<256x256xf32>
    %cst_48 = arith.constant dense<0.000000e+00> : vector<8x256xf32>
    %62 = tpu.matmul %56, %61, %cst_48 {dimension_numbers = #tpu.dot_dimension_numbers<[1], [0], [0], [1], [0, 0, 1, 1], [], []>} : vector<8x256xf32>, vector<256x256xf32>, vector<8x256xf32> -> vector<8x256xf32>
    %c2_49 = arith.constant 2 : index
    %c0_50 = arith.constant 0 : index
    %c0_51 = arith.constant 0 : index
    %63 = vector.load %arg2[%c2_49, %c0_50, %c0_51] : memref<9x256x256xf32, #tpu.memory_space<vmem>>, vector<1x256x256xf32>
    %64 = vector.shape_cast %63 : vector<1x256x256xf32> to vector<256x256xf32>
    %cst_52 = arith.constant dense<0.000000e+00> : vector<8x256xf32>
    %65 = tpu.matmul %56, %64, %cst_52 {dimension_numbers = #tpu.dot_dimension_numbers<[1], [0], [0], [1], [0, 0, 1, 1], [], []>} : vector<8x256xf32>, vector<256x256xf32>, vector<8x256xf32> -> vector<8x256xf32>
    %c3_53 = arith.constant 3 : index
    %c0_54 = arith.constant 0 : index
    %c0_55 = arith.constant 0 : index
    %66 = vector.load %arg2[%c3_53, %c0_54, %c0_55] : memref<9x256x256xf32, #tpu.memory_space<vmem>>, vector<1x256x256xf32>
    %67 = vector.shape_cast %66 : vector<1x256x256xf32> to vector<256x256xf32>
    %cst_56 = arith.constant dense<0.000000e+00> : vector<8x256xf32>
    %68 = tpu.matmul %56, %67, %cst_56 {dimension_numbers = #tpu.dot_dimension_numbers<[1], [0], [0], [1], [0, 0, 1, 1], [], []>} : vector<8x256xf32>, vector<256x256xf32>, vector<8x256xf32> -> vector<8x256xf32>
    %c4_57 = arith.constant 4 : index
    %c0_58 = arith.constant 0 : index
    %c0_59 = arith.constant 0 : index
    %69 = vector.load %arg2[%c4_57, %c0_58, %c0_59] : memref<9x256x256xf32, #tpu.memory_space<vmem>>, vector<1x256x256xf32>
    %70 = vector.shape_cast %69 : vector<1x256x256xf32> to vector<256x256xf32>
    %cst_60 = arith.constant dense<0.000000e+00> : vector<8x256xf32>
    %71 = tpu.matmul %56, %70, %cst_60 {dimension_numbers = #tpu.dot_dimension_numbers<[1], [0], [0], [1], [0, 0, 1, 1], [], []>} : vector<8x256xf32>, vector<256x256xf32>, vector<8x256xf32> -> vector<8x256xf32>
    %c5_61 = arith.constant 5 : index
    %c0_62 = arith.constant 0 : index
    %c0_63 = arith.constant 0 : index
    %72 = vector.load %arg2[%c5_61, %c0_62, %c0_63] : memref<9x256x256xf32, #tpu.memory_space<vmem>>, vector<1x256x256xf32>
    %73 = vector.shape_cast %72 : vector<1x256x256xf32> to vector<256x256xf32>
    %cst_64 = arith.constant dense<0.000000e+00> : vector<8x256xf32>
    %74 = tpu.matmul %56, %73, %cst_64 {dimension_numbers = #tpu.dot_dimension_numbers<[1], [0], [0], [1], [0, 0, 1, 1], [], []>} : vector<8x256xf32>, vector<256x256xf32>, vector<8x256xf32> -> vector<8x256xf32>
    %c6_65 = arith.constant 6 : index
    %c0_66 = arith.constant 0 : index
    %c0_67 = arith.constant 0 : index
    %75 = vector.load %arg2[%c6_65, %c0_66, %c0_67] : memref<9x256x256xf32, #tpu.memory_space<vmem>>, vector<1x256x256xf32>
    %76 = vector.shape_cast %75 : vector<1x256x256xf32> to vector<256x256xf32>
    %cst_68 = arith.constant dense<0.000000e+00> : vector<8x256xf32>
    %77 = tpu.matmul %56, %76, %cst_68 {dimension_numbers = #tpu.dot_dimension_numbers<[1], [0], [0], [1], [0, 0, 1, 1], [], []>} : vector<8x256xf32>, vector<256x256xf32>, vector<8x256xf32> -> vector<8x256xf32>
    %c7_69 = arith.constant 7 : index
    %c0_70 = arith.constant 0 : index
    %c0_71 = arith.constant 0 : index
    %78 = vector.load %arg2[%c7_69, %c0_70, %c0_71] : memref<9x256x256xf32, #tpu.memory_space<vmem>>, vector<1x256x256xf32>
    %79 = vector.shape_cast %78 : vector<1x256x256xf32> to vector<256x256xf32>
    %cst_72 = arith.constant dense<0.000000e+00> : vector<8x256xf32>
    %80 = tpu.matmul %56, %79, %cst_72 {dimension_numbers = #tpu.dot_dimension_numbers<[1], [0], [0], [1], [0, 0, 1, 1], [], []>} : vector<8x256xf32>, vector<256x256xf32>, vector<8x256xf32> -> vector<8x256xf32>
    %c8_73 = arith.constant 8 : index
    %c0_74 = arith.constant 0 : index
    %c0_75 = arith.constant 0 : index
    %81 = vector.load %arg2[%c8_73, %c0_74, %c0_75] : memref<9x256x256xf32, #tpu.memory_space<vmem>>, vector<1x256x256xf32>
    %82 = vector.shape_cast %81 : vector<1x256x256xf32> to vector<256x256xf32>
    %cst_76 = arith.constant dense<0.000000e+00> : vector<8x256xf32>
    %83 = tpu.matmul %56, %82, %cst_76 {dimension_numbers = #tpu.dot_dimension_numbers<[1], [0], [0], [1], [0, 0, 1, 1], [], []>} : vector<8x256xf32>, vector<256x256xf32>, vector<8x256xf32> -> vector<8x256xf32>
    %84 = tpu.concatenate %59, %62, %65, %68, %71, %74, %77, %80, %83 in 0 : vector<8x256xf32>, vector<8x256xf32>, vector<8x256xf32>, vector<8x256xf32>, vector<8x256xf32>, vector<8x256xf32>, vector<8x256xf32>, vector<8x256xf32>, vector<8x256xf32> -> vector<72x256xf32>
    %c0_77 = arith.constant 0 : index
    %c0_78 = arith.constant 0 : index
    %85 = vector.load %arg5[%c0_77, %c0_78] : memref<8x72xf32, #tpu.memory_space<vmem>>, vector<8x72xf32>
    %cst_79 = arith.constant dense<0.000000e+00> : vector<8x256xf32>
    %86 = tpu.matmul %85, %84, %cst_79 {dimension_numbers = #tpu.dot_dimension_numbers<[1], [0], [0], [1], [0, 0, 1, 1], [], []>} : vector<8x72xf32>, vector<72x256xf32>, vector<8x256xf32> -> vector<8x256xf32>
    %c0_80 = arith.constant 0 : index
    %c0_81 = arith.constant 0 : index
    %87 = vector.load %arg6[%c0_80, %c0_81] : memref<8x1xf32, #tpu.memory_space<vmem>>, vector<8x1xf32>
    %88 = vector.broadcast %87 : vector<8x1xf32> to vector<8x256xf32>
    %89 = arith.addf %86, %88 : vector<8x256xf32>
    %cst_82 = arith.constant dense<0.000000e+00> : vector<8xf32>
    %90 = vector.multi_reduction <add>, %89, %cst_82 [1] : vector<8x256xf32> to vector<8xf32>
    %91 = vector.shape_cast %90 : vector<8xf32> to vector<8x1xf32>
    %cst_83 = arith.constant 3.906250e-03 : f32
    %92 = vector.broadcast %cst_83 : f32 to vector<8x1xf32>
    %93 = arith.mulf %91, %92 : vector<8x1xf32>
    %94 = arith.mulf %89, %89 : vector<8x256xf32>
    %cst_84 = arith.constant dense<0.000000e+00> : vector<8xf32>
    %95 = vector.multi_reduction <add>, %94, %cst_84 [1] : vector<8x256xf32> to vector<8xf32>
    %96 = vector.shape_cast %95 : vector<8xf32> to vector<8x1xf32>
    %cst_85 = arith.constant 3.906250e-03 : f32
    %97 = vector.broadcast %cst_85 : f32 to vector<8x1xf32>
    %98 = arith.mulf %96, %97 : vector<8x1xf32>
    %99 = arith.mulf %93, %93 : vector<8x1xf32>
    %100 = arith.subf %98, %99 : vector<8x1xf32>
    %cst_86 = arith.constant 0.000000e+00 : f32
    %101 = vector.broadcast %cst_86 : f32 to vector<8x1xf32>
    %102 = arith.maximumf %100, %101 : vector<8x1xf32>
    %103 = vector.broadcast %93 : vector<8x1xf32> to vector<8x256xf32>
    %104 = arith.subf %89, %103 : vector<8x256xf32>
    %cst_87 = arith.constant 9.99999974E-6 : f32
    %105 = vector.broadcast %cst_87 : f32 to vector<8x1xf32>
    %106 = arith.addf %102, %105 : vector<8x1xf32>
    %107 = math.rsqrt %106 : vector<8x1xf32>
    %108 = vector.broadcast %107 : vector<8x1xf32> to vector<8x256xf32>
    %109 = arith.mulf %104, %108 : vector<8x256xf32>
    %110 = arith.addf %1, %109 : vector<8x256xf32>
    %c0_88 = arith.constant 0 : index
    %c0_89 = arith.constant 0 : index
    %c0_90 = arith.constant 0 : index
    %111 = vector.load %arg7[%c0_88, %c0_89, %c0_90] : memref<1x8x256xf32, #tpu.memory_space<vmem>>, vector<1x8x256xf32>
    %112 = vector.shape_cast %111 : vector<1x8x256xf32> to vector<8x256xf32>
    %113 = vector.shape_cast %110 : vector<8x256xf32> to vector<1x8x256xf32>
    tpu.vector_store %arg7[%c0_88, %c0_89, %c0_90], %113 {strides = array<i32>} : memref<1x8x256xf32, #tpu.memory_space<vmem>>, vector<1x8x256xf32>,
    return
  }
  func.func @transform_0(%arg0: i32) -> (i32, i32, i32) {
    %c0_i32 = arith.constant 0 : i32
    %c0_i32_0 = arith.constant 0 : i32
    %c0_i32_1 = arith.constant 0 : i32
    return %arg0, %c0_i32, %c0_i32_0 : i32, i32, i32
  }
  func.func @transform_1(%arg0: i32) -> (i32, i32, i32) {
    %c0_i32 = arith.constant 0 : i32
    %c0_i32_0 = arith.constant 0 : i32
    %c0_i32_1 = arith.constant 0 : i32
    %c0_i32_2 = arith.constant 0 : i32
    return %c0_i32, %c0_i32_0, %c0_i32_1 : i32, i32, i32
  }
  func.func @transform_2(%arg0: i32) -> (i32, i32) {
    %c0_i32 = arith.constant 0 : i32
    %c0_i32_0 = arith.constant 0 : i32
    %c0_i32_1 = arith.constant 0 : i32
    return %c0_i32, %c0_i32_0 : i32, i32
  }
  func.func @transform_3(%arg0: i32) -> (i32, i32) {
    %c0_i32 = arith.constant 0 : i32
    %c0_i32_0 = arith.constant 0 : i32
    %c0_i32_1 = arith.constant 0 : i32
    return %c0_i32, %c0_i32_0 : i32, i32
  }
  func.func @transform_4(%arg0: i32) -> (i32, i32) {
    %c0_i32 = arith.constant 0 : i32
    %c0_i32_0 = arith.constant 0 : i32
    %c0_i32_1 = arith.constant 0 : i32
    return %c0_i32, %c0_i32_0 : i32, i32
  }
  func.func @transform_5(%arg0: i32) -> (i32, i32) {
    %c0_i32 = arith.constant 0 : i32
    %c0_i32_0 = arith.constant 0 : i32
    %c0_i32_1 = arith.constant 0 : i32
    return %c0_i32, %c0_i32_0 : i32, i32
  }
  func.func @transform_6(%arg0: i32) -> (i32, i32, i32) {
    %c0_i32 = arith.constant 0 : i32
    %c0_i32_0 = arith.constant 0 : i32
    %c0_i32_1 = arith.constant 0 : i32
    return %arg0, %c0_i32, %c0_i32_0 : i32, i32, i32
  }
}

</mosaic_0001>

<llo_original>
// kernel: resnet_block_forward.1
$region0: #{resnet_block_forward.1}
  #allocation0 [shape = 'u32[]', space=smem, size = 0x4, offset = 0x4, fixed_abs, tag = 'smem constant byte address 0x4 - core index']
  #allocation1 [shape = 'u32[144,128]{1,0:T(1,128)}', space=vmem, size = 0x12000, scoped, tag = 'internal scratch']
  %s0 = inlined_call_operand.vmem [shape: f32[2,8,256], index: 0, kind: input, shape index: {}]
  %s1 = inlined_call_operand.hbm [shape: f32[9,256,256], index: 1, kind: input, shape index: {}]
  %s2 = inlined_call_operand.hbm [shape: f32[8,72], index: 2, kind: input, shape index: {}]
  %s3 = inlined_call_operand.vmem [shape: f32[8,1], index: 3, kind: input, shape index: {}]
  %s4 = inlined_call_operand.hbm [shape: f32[8,72], index: 4, kind: input, shape index: {}]
  %s5 = inlined_call_operand.vmem [shape: f32[8,1], index: 5, kind: input, shape index: {}]
  %s6 = inlined_call_operand.vmem [shape: f32[2,8,256], index: 6, kind: output, shape index: {}]
  %s7 = sld [smem:[#allocation0]]
  $region69: #{resnet_block_forward.1} parent=0
    _
  %s9 = ssub.s32 1, %s7
  %s10 = scalar_select 0, %s9, %s7
  $region1: #{resnet_block_forward.1} parent=0
    #allocation2 [shape = 'u8[2359296]{0}', space=vmem, size = 0x240000, scoped, tag = 'input window, operand 1, single buffered']
    #allocation3 [shape = 's32[2]{0}', space=sflag, size = 0x8, scoped, tag = 'scoped memory for resnet_block_forward.1']
    #allocation4 [shape = 'u8[4096]{0}', space=vmem, size = 0x1000, scoped, tag = 'input window, operand 2, single buffered']
    #allocation5 [shape = 's32[1]{0}', space=sflag, size = 0x4, scoped, tag = 'scoped memory for resnet_block_forward.1']
    #allocation6 [shape = 'u8[4096]{0}', space=vmem, size = 0x1000, scoped, tag = 'input window, operand 4, single buffered']
    %11 = vsyncpa [#allocation3], 0
    %12 = vsyncpa [#allocation5], 0
    loop: start=0, step=1, limit=4
    $region2: #{resnet_block_forward.1} parent=1 // loop_pre_header
      _
    $region3: #{resnet_block_forward.1} parent=1 // loop_header
      %s14 = sphi 0, %s18
      %p15 = scmp.ge.s32.totalorder %s14, 4
      %s24 = sphi 0, %s26
      %s27 = sphi 0, %s24
      %s28 = sphi 0, %s27
      %s44 = sphi 0, %s28
      %s48 = sphi 0, %s48
      %s50 = sphi 0, %s48
      %s51 = sphi 0, %s50
      %s65 = sphi 0, %s51
      %s69 = sphi 0, %s69
      %s71 = sphi 0, %s69
      %s72 = sphi 0, %s71
      %s86 = sphi 0, %s72
      %s90 = sphi 0, %s90
      %s92 = sphi 0, %s90
      %s93 = sphi 0, %s92
      %s107 = sphi 0, %s93
      %s111 = sphi 0, %s111
      %s113 = sphi 0, %s111
      %s114 = sphi 0, %s113
      %s128 = sphi 0, %s114
      %s132 = sphi 0, %s132
      %s134 = sphi 0, %s132
      %s135 = sphi 0, %s134
      %s149 = sphi 0, %s135
      %s155 = sphi 0, %s157
      %s158 = sphi 0, %s155
      %s159 = sphi 0, %s158
      %s175 = sphi 0, %s159
    $region4: #{resnet_block_forward.1} parent=1 // loop_header_branch
      %17 = sbr.rel (%p15) target = $region8
    $region5: #{resnet_block_forward.1} parent=1 // loop_body
      %s19 = ssub.s32 %s14, 1
      %s20 = ssub.s32 %s14, 2
      %s21 = sadd.s32 %s14, 1
      %s22 = ssub.s32 %s14, %s21
      %p23 = scmp.eq.s32.totalorder %s22, 0
      %s25 = sadd.s32 %s24, 1
      %s26 = scalar_select %p23, %s24, %s25
      %p29 = pneg %p23
      %p30 = scmp.eq.s32.totalorder %s14, 1
      %p31 = por %p29, %p30
      %p32 = scmp.ne.s32.totalorder %s24, %s27
      %p33 = scmp.eq.s32.totalorder %s14, 0
      %p34 = por %p32, %p33
      %p35 = scmp.ne.s32.totalorder %s24, %s27
      %p36 = scmp.eq.s32.totalorder %s19, 1
      %p37 = por %p35, %p36
      %p38 = scmp.ne.s32.totalorder %s27, %s28
      %p39 = scmp.eq.s32.totalorder %s19, 0
      %p40 = por %p38, %p39
      %p41 = scmp.ne.s32.totalorder %s27, %s28
      %p42 = scmp.eq.s32.totalorder %s20, 1
      %p43 = por %p41, %p42
      %p45 = scmp.ne.s32.totalorder %s28, %s44
      %p46 = scmp.eq.s32.totalorder %s20, 0
      %p47 = por %p45, %p46
      %s49 = sadd.s32 %s48, 1
      %p52 = scmp.eq.s32.totalorder %s14, 1
      %p53 = scmp.ne.s32.totalorder %s48, %s50
      %p54 = scmp.eq.s32.totalorder %s14, 0
      %p55 = por %p53, %p54
      %p56 = scmp.ne.s32.totalorder %s48, %s50
      %p57 = scmp.eq.s32.totalorder %s19, 1
      %p58 = por %p56, %p57
      %p59 = scmp.ne.s32.totalorder %s50, %s51
      %p60 = scmp.eq.s32.totalorder %s19, 0
      %p61 = por %p59, %p60
      %p62 = scmp.ne.s32.totalorder %s50, %s51
      %p63 = scmp.eq.s32.totalorder %s20, 1
      %p64 = por %p62, %p63
      %p66 = scmp.ne.s32.totalorder %s51, %s65
      %p67 = scmp.eq.s32.totalorder %s20, 0
      %p68 = por %p66, %p67
      %s70 = sadd.s32 %s69, 1
      %p73 = scmp.eq.s32.totalorder %s14, 1
      %p74 = scmp.ne.s32.totalorder %s69, %s71
      %p75 = scmp.eq.s32.totalorder %s14, 0
      %p76 = por %p74, %p75
      %p77 = scmp.ne.s32.totalorder %s69, %s71
      %p78 = scmp.eq.s32.totalorder %s19, 1
      %p79 = por %p77, %p78
      %p80 = scmp.ne.s32.totalorder %s71, %s72
      %p81 = scmp.eq.s32.totalorder %s19, 0
      %p82 = por %p80, %p81
      %p83 = scmp.ne.s32.totalorder %s71, %s72
      %p84 = scmp.eq.s32.totalorder %s20, 1
      %p85 = por %p83, %p84
      %p87 = scmp.ne.s32.totalorder %s72, %s86
      %p88 = scmp.eq.s32.totalorder %s20, 0
      %p89 = por %p87, %p88
      %s91 = sadd.s32 %s90, 1
      %p94 = scmp.eq.s32.totalorder %s14, 1
      %p95 = scmp.ne.s32.totalorder %s90, %s92
      %p96 = scmp.eq.s32.totalorder %s14, 0
      %p97 = por %p95, %p96
      %p98 = scmp.ne.s32.totalorder %s90, %s92
      %p99 = scmp.eq.s32.totalorder %s19, 1
      %p100 = por %p98, %p99
      %p101 = scmp.ne.s32.totalorder %s92, %s93
      %p102 = scmp.eq.s32.totalorder %s19, 0
      %p103 = por %p101, %p102
      %p104 = scmp.ne.s32.totalorder %s92, %s93
      %p105 = scmp.eq.s32.totalorder %s20, 1
      %p106 = por %p104, %p105
      %p108 = scmp.ne.s32.totalorder %s93, %s107
      %p109 = scmp.eq.s32.totalorder %s20, 0
      %p110 = por %p108, %p109
      %s112 = sadd.s32 %s111, 1
      %p115 = scmp.eq.s32.totalorder %s14, 1
      %p116 = scmp.ne.s32.totalorder %s111, %s113
      %p117 = scmp.eq.s32.totalorder %s14, 0
      %p118 = por %p116, %p117
      %p119 = scmp.ne.s32.totalorder %s111, %s113
      %p120 = scmp.eq.s32.totalorder %s19, 1
      %p121 = por %p119, %p120
      %p122 = scmp.ne.s32.totalorder %s113, %s114
      %p123 = scmp.eq.s32.totalorder %s19, 0
      %p124 = por %p122, %p123
      %p125 = scmp.ne.s32.totalorder %s113, %s114
      %p126 = scmp.eq.s32.totalorder %s20, 1
      %p127 = por %p125, %p126
      %p129 = scmp.ne.s32.totalorder %s114, %s128
      %p130 = scmp.eq.s32.totalorder %s20, 0
      %p131 = por %p129, %p130
      %s133 = sadd.s32 %s132, 1
      %p136 = scmp.eq.s32.totalorder %s14, 1
      %p137 = scmp.ne.s32.totalorder %s132, %s134
      %p138 = scmp.eq.s32.totalorder %s14, 0
      %p139 = por %p137, %p138
      %p140 = scmp.ne.s32.totalorder %s132, %s134
      %p141 = scmp.eq.s32.totalorder %s19, 1
      %p142 = por %p140, %p141
      %p143 = scmp.ne.s32.totalorder %s134, %s135
      %p144 = scmp.eq.s32.totalorder %s19, 0
      %p145 = por %p143, %p144
      %p146 = scmp.ne.s32.totalorder %s134, %s135
      %p147 = scmp.eq.s32.totalorder %s20, 1
      %p148 = por %p146, %p147
      %p150 = scmp.ne.s32.totalorder %s135, %s149
      %p151 = scmp.eq.s32.totalorder %s20, 0
      %p152 = por %p150, %p151
      %s153 = ssub.s32 %s14, %s21
      %p154 = scmp.eq.s32.totalorder %s153, 0
      %s156 = sadd.s32 %s155, 1
      %s157 = scalar_select %p154, %s155, %s156
      %p160 = pneg %p154
      %p161 = scmp.eq.s32.totalorder %s14, 1
      %p162 = por %p160, %p161
      %p163 = scmp.ne.s32.totalorder %s155, %s158
      %p164 = scmp.eq.s32.totalorder %s14, 0
      %p165 = por %p163, %p164
      %p166 = scmp.ne.s32.totalorder %s155, %s158
      %p167 = scmp.eq.s32.totalorder %s19, 1
      %p168 = por %p166, %p167
      %p169 = scmp.ne.s32.totalorder %s158, %s159
      %p170 = scmp.eq.s32.totalorder %s19, 0
      %p171 = por %p169, %p170
      %p172 = scmp.ne.s32.totalorder %s158, %s159
      %p173 = scmp.eq.s32.totalorder %s20, 1
      %p174 = por %p172, %p173
      %p176 = scmp.ne.s32.totalorder %s159, %s175
      %p177 = scmp.eq.s32.totalorder %s20, 0
      %p178 = por %p176, %p177
      %p179 = scmp.le.s32.totalorder 1, %s14
      %p180 = scmp.lt.s32.totalorder %s14, 3
      %p181 = pnand %p179, %p180
      %p182 = pneg %p181
      // Predicated region
      $region9: #{resnet_block_forward.1} parent=5 // pred_check
        _
      $region10: #{resnet_block_forward.1} parent=5 // pred_check_branch
        %184 = sbr.rel (%p181) target = $region12
      $region11: #{resnet_block_forward.1} parent=5 // pred_region
        %s185 = ssub.s32 %s14, 1
        // Predicated region
        $region13: #{resnet_block_forward.1} parent=11 // pred_check
          %p186 = pneg %p61
        $region14: #{resnet_block_forward.1} parent=11 // pred_check_branch
          %188 = sbr.rel (%p186) target = $region16
        $region15: #{resnet_block_forward.1} parent=11 // pred_region
          %s190 = ssub.s32 73728, 73728
          %191 = vsyncadd [#allocation3], %s190
          %s192 = sshll.u32 [#allocation2], 4
          %s193 = int_to_ptr.vmem [resolvable:$true] %s192
          %198 = dma.hbm_to_vmem [thread:$0]  %s1, 73728, %s193, [#allocation3], 256, 256, 16
        $region16: #{resnet_block_forward.1} parent=11 // pred_fallthru
          _
        // Predicated region
        $region17: #{resnet_block_forward.1} parent=11 // pred_check
          %p199 = pneg %p82
        $region18: #{resnet_block_forward.1} parent=11 // pred_check_branch
          %201 = sbr.rel (%p199) target = $region20
        $region19: #{resnet_block_forward.1} parent=11 // pred_region
          %s203 = ssub.s32 128, 128
          %204 = vsyncadd [#allocation5], %s203
          %s206 = sshll.u32 [#allocation4], 4
          %s207 = int_to_ptr.vmem [resolvable:$true] %s206
          %209 = dma.hbm_to_vmem [thread:$0]  %s2, 128, %s207, [#allocation5]
        $region20: #{resnet_block_forward.1} parent=11 // pred_fallthru
          _
        // Predicated region
        $region21: #{resnet_block_forward.1} parent=11 // pred_check
          %p210 = pneg %p103
        $region22: #{resnet_block_forward.1} parent=11 // pred_check_branch
          %212 = sbr.rel (%p210) target = $region24
        $region23: #{resnet_block_forward.1} parent=11 // pred_region
          _
        $region24: #{resnet_block_forward.1} parent=11 // pred_fallthru
          _
        // Predicated region
        $region25: #{resnet_block_forward.1} parent=11 // pred_check
          %p213 = pneg %p124
        $region26: #{resnet_block_forward.1} parent=11 // pred_check_branch
          %215 = sbr.rel (%p213) target = $region28
        $region27: #{resnet_block_forward.1} parent=11 // pred_region
          %s217 = ssub.s32 128, 128
          %218 = vsyncadd [#allocation5], %s217
          %s220 = sshll.u32 [#allocation6], 4
          %s221 = int_to_ptr.vmem [resolvable:$true] %s220
          %223 = dma.hbm_to_vmem [thread:$0]  %s4, 128, %s221, [#allocation5]
        $region28: #{resnet_block_forward.1} parent=11 // pred_fallthru
          _
        // Predicated region
        $region29: #{resnet_block_forward.1} parent=11 // pred_check
          %p224 = pneg %p145
        $region30: #{resnet_block_forward.1} parent=11 // pred_check_branch
          %226 = sbr.rel (%p224) target = $region32
        $region31: #{resnet_block_forward.1} parent=11 // pred_region
          _
        $region32: #{resnet_block_forward.1} parent=11 // pred_fallthru
          _
      $region12: #{resnet_block_forward.1} parent=5 // pred_fallthru
        _
      %p227 = scmp.lt.s32.totalorder %s14, 2
      // Predicated region
      $region33: #{resnet_block_forward.1} parent=5 // pred_check
        %p228 = pneg %p227
      $region34: #{resnet_block_forward.1} parent=5 // pred_check_branch
        %230 = sbr.rel (%p228) target = $region36
      $region35: #{resnet_block_forward.1} parent=5 // pred_region
        // Predicated region
        $region37: #{resnet_block_forward.1} parent=35 // pred_check
          %p231 = pneg %p34
        $region38: #{resnet_block_forward.1} parent=35 // pred_check_branch
          %233 = sbr.rel (%p231) target = $region40
        $region39: #{resnet_block_forward.1} parent=35 // pred_region
          %p234 = scmp.lt.s32.totalorder %s14, 1
          %s235 = scalar_select %p234, %s14, 1
          %s236 = smul.addr %s235, 2
          %s237 = smul.addr %s236, 8
          %s238 = scalar_lea.vmem %s0, %s237
        $region40: #{resnet_block_forward.1} parent=35 // pred_fallthru
          _
      $region36: #{resnet_block_forward.1} parent=5 // pred_fallthru
        _
      %p239 = scmp.le.s32.totalorder 1, %s14
      %p240 = scmp.lt.s32.totalorder %s14, 3
      %p241 = pnand %p239, %p240
      %p242 = pneg %p241
      // Predicated region
      $region41: #{resnet_block_forward.1} parent=5 // pred_check
        _
      $region42: #{resnet_block_forward.1} parent=5 // pred_check_branch
        %244 = sbr.rel (%p241) target = $region44
      $region43: #{resnet_block_forward.1} parent=5 // pred_region
        %s245 = ssub.s32 %s14, 1
        // Predicated region
        $region45: #{resnet_block_forward.1} parent=43 // pred_check
          %p246 = pneg %p61
        $region46: #{resnet_block_forward.1} parent=43 // pred_check_branch
          %248 = sbr.rel (%p246) target = $region48
        $region47: #{resnet_block_forward.1} parent=43 // pred_region
          %249 = dma.done [#allocation3], 73728
        $region48: #{resnet_block_forward.1} parent=43 // pred_fallthru
          _
        // Predicated region
        $region49: #{resnet_block_forward.1} parent=43 // pred_check
          %p250 = pneg %p82
        $region50: #{resnet_block_forward.1} parent=43 // pred_check_branch
          %252 = sbr.rel (%p250) target = $region52
        $region51: #{resnet_block_forward.1} parent=43 // pred_region
          %253 = dma.done [#allocation5], 128
        $region52: #{resnet_block_forward.1} parent=43 // pred_fallthru
          _
        // Predicated region
        $region53: #{resnet_block_forward.1} parent=43 // pred_check
          %p254 = pneg %p124
        $region54: #{resnet_block_forward.1} parent=43 // pred_check_branch
          %256 = sbr.rel (%p254) target = $region56
        $region55: #{resnet_block_forward.1} parent=43 // pred_region
          %257 = dma.done [#allocation5], 128
        $region56: #{resnet_block_forward.1} parent=43 // pred_fallthru
          _
        %p258 = scmp.lt.s32.totalorder %s19, 1
        %s259 = scalar_select %p258, %s19, 1
        %s260 = smul.addr %s259, 2
        %s261 = smul.addr %s260, 8
        %s262 = scalar_lea.vmem %s0, %s261
        %p263 = pneg %p40
        %p264 = pneg %p37
        %p265 = pneg %p61
        %p266 = pneg %p58
        %p267 = pneg %p82
        %p268 = pneg %p79
        %p269 = pneg %p103
        %p270 = pneg %p100
        %p271 = pneg %p124
        %p272 = pneg %p121
        %p273 = pneg %p145
        %p274 = pneg %p142
        %p275 = pneg %p171
        %p276 = pneg %p168
        %p277 = scmp.lt.s32.totalorder %s19, 1
        %s278 = scalar_select %p277, %s19, 1
        %s279 = smul.addr %s278, 2
        %s280 = smul.addr %s279, 8
        %s281 = scalar_lea.vmem %s6, %s280
        %p282 = scmp.lt.s32.totalorder %s19, 1
        %s283 = scalar_select %p282, %s19, 1
        %s284 = smul.addr %s283, 2
        %s285 = smul.addr %s284, 8
        %s286 = scalar_lea.vmem %s0, %s285
        %p287 = scmp.lt.s32.totalorder %s19, 1
        %s288 = scalar_select %p287, %s19, 1
        %s289 = smul.addr %s288, 2
        %s290 = smul.addr %s289, 8
        %s291 = scalar_lea.vmem %s6, %s290
        %v292 = vld [vmem:[%s286] sm:$0xff]
        %v293 = vld [vmem:[%s286 + $0x8] sm:$0xff]
        %v294 = vld [vmem:[#allocation2] sm:$0xff]
        %v295 = vld [vmem:[#allocation2 + $0x8] sm:$0xff]
        %v296 = vld [vmem:[#allocation2 + $0x10] sm:$0xff]
        %v297 = vld [vmem:[#allocation2 + $0x18] sm:$0xff]
        %v298 = vld [vmem:[#allocation2 + $0x20] sm:$0xff]
        %v299 = vld [vmem:[#allocation2 + $0x28] sm:$0xff]
        %v300 = vld [vmem:[#allocation2 + $0x30] sm:$0xff]
        %v301 = vld [vmem:[#allocation2 + $0x38] sm:$0xff]
        %v302 = vld [vmem:[#allocation2 + $0x40] sm:$0xff]
        %v303 = vld [vmem:[#allocation2 + $0x48] sm:$0xff]
        %v304 = vld [vmem:[#allocation2 + $0x50] sm:$0xff]
        %v305 = vld [vmem:[#allocation2 + $0x58] sm:$0xff]
        %v306 = vld [vmem:[#allocation2 + $0x60] sm:$0xff]
        %v307 = vld [vmem:[#allocation2 + $0x68] sm:$0xff]
        %v308 = vld [vmem:[#allocation2 + $0x70] sm:$0xff]
        %v309 = vld [vmem:[#allocation2 + $0x78] sm:$0xff]
        %v310 = vld [vmem:[#allocation2 + $0x80] sm:$0xff]
        %v311 = vld [vmem:[#allocation2 + $0x88] sm:$0xff]
        %v312 = vld [vmem:[#allocation2 + $0x90] sm:$0xff]
        %v313 = vld [vmem:[#allocation2 + $0x98] sm:$0xff]
        %v314 = vld [vmem:[#allocation2 + $0xa0] sm:$0xff]
        %v315 = vld [vmem:[#allocation2 + $0xa8] sm:$0xff]
        %v316 = vld [vmem:[#allocation2 + $0xb0] sm:$0xff]
        %v317 = vld [vmem:[#allocation2 + $0xb8] sm:$0xff]
        %v318 = vld [vmem:[#allocation2 + $0xc0] sm:$0xff]
        %v319 = vld [vmem:[#allocation2 + $0xc8] sm:$0xff]
        %v320 = vld [vmem:[#allocation2 + $0xd0] sm:$0xff]
        %v321 = vld [vmem:[#allocation2 + $0xd8] sm:$0xff]
        %v322 = vld [vmem:[#allocation2 + $0xe0] sm:$0xff]
        %v323 = vld [vmem:[#allocation2 + $0xe8] sm:$0xff]
        %v324 = vld [vmem:[#allocation2 + $0xf0] sm:$0xff]
        %v325 = vld [vmem:[#allocation2 + $0xf8] sm:$0xff]
        %v326 = vld [vmem:[#allocation2 + $0x100] sm:$0xff]
        %v327 = vld [vmem:[#allocation2 + $0x108] sm:$0xff]
        %v328 = vld [vmem:[#allocation2 + $0x110] sm:$0xff]
        %v329 = vld [vmem:[#allocation2 + $0x118] sm:$0xff]
        %v330 = vld [vmem:[#allocation2 + $0x120] sm:$0xff]
        %v331 = vld [vmem:[#allocation2 + $0x128] sm:$0xff]
        %v332 = vld [vmem:[#allocation2 + $0x130] sm:$0xff]
        %v333 = vld [vmem:[#allocation2 + $0x138] sm:$0xff]
        %v334 = vld [vmem:[#allocation2 + $0x140] sm:$0xff]
        %v335 = vld [vmem:[#allocation2 + $0x148] sm:$0xff]
        %v336 = vld [vmem:[#allocation2 + $0x150] sm:$0xff]
        %v337 = vld [vmem:[#allocation2 + $0x158] sm:$0xff]
        %v338 = vld [vmem:[#allocation2 + $0x160] sm:$0xff]
        %v339 = vld [vmem:[#allocation2 + $0x168] sm:$0xff]
        %v340 = vld [vmem:[#allocation2 + $0x170] sm:$0xff]
        %v341 = vld [vmem:[#allocation2 + $0x178] sm:$0xff]
        %v342 = vld [vmem:[#allocation2 + $0x180] sm:$0xff]
        %v343 = vld [vmem:[#allocation2 + $0x188] sm:$0xff]
        %v344 = vld [vmem:[#allocation2 + $0x190] sm:$0xff]
        %v345 = vld [vmem:[#allocation2 + $0x198] sm:$0xff]
        %v346 = vld [vmem:[#allocation2 + $0x1a0] sm:$0xff]
        %v347 = vld [vmem:[#allocation2 + $0x1a8] sm:$0xff]
        %v348 = vld [vmem:[#allocation2 + $0x1b0] sm:$0xff]
        %v349 = vld [vmem:[#allocation2 + $0x1b8] sm:$0xff]
        %v350 = vld [vmem:[#allocation2 + $0x1c0] sm:$0xff]
        %v351 = vld [vmem:[#allocation2 + $0x1c8] sm:$0xff]
        %v352 = vld [vmem:[#allocation2 + $0x1d0] sm:$0xff]
        %v353 = vld [vmem:[#allocation2 + $0x1d8] sm:$0xff]
        %v354 = vld [vmem:[#allocation2 + $0x1e0] sm:$0xff]
        %v355 = vld [vmem:[#allocation2 + $0x1e8] sm:$0xff]
        %v356 = vld [vmem:[#allocation2 + $0x1f0] sm:$0xff]
        %v357 = vld [vmem:[#allocation2 + $0x1f8] sm:$0xff]
        %358 = vmatprep.subr.mxu0 %v295
        %359 = vmatpush1.msra.mxu0 %v294
        %360 = vmatprep.subr.mxu0 %v297
        %361 = vmatpush1.msra.mxu0 %v296
        %362 = vmatprep.subr.mxu0 %v299
        %363 = vmatpush1.msra.mxu0 %v298
        %364 = vmatprep.subr.mxu0 %v301
        %365 = vmatpush1.msra.mxu0 %v300
        %366 = vmatprep.subr.mxu0 %v303
        %367 = vmatpush1.msra.mxu0 %v302
        %368 = vmatprep.subr.mxu0 %v305
        %369 = vmatpush1.msra.mxu0 %v304
        %370 = vmatprep.subr.mxu0 %v307
        %371 = vmatpush1.msra.mxu0 %v306
        %372 = vmatprep.subr.mxu0 %v309
        %373 = vmatpush1.msra.mxu0 %v308
        %374 = vmatprep.subr.mxu0 %v311
        %375 = vmatpush1.msra.mxu0 %v310
        %376 = vmatprep.subr.mxu0 %v313
        %377 = vmatpush1.msra.mxu0 %v312
        %378 = vmatprep.subr.mxu0 %v315
        %379 = vmatpush1.msra.mxu0 %v314
        %380 = vmatprep.subr.mxu0 %v317
        %381 = vmatpush1.msra.mxu0 %v316
        %382 = vmatprep.subr.mxu0 %v319
        %383 = vmatpush1.msra.mxu0 %v318
        %384 = vmatprep.subr.mxu0 %v321
        %385 = vmatpush1.msra.mxu0 %v320
        %386 = vmatprep.subr.mxu0 %v323
        %387 = vmatpush1.msra.mxu0 %v322
        %388 = vmatprep.subr.mxu0 %v325
        %389 = vmatpush1.msra.mxu0 %v324
        %390 = vmatprep.subr.mxu0 %v327
        %391 = vmatpush1.msra.mxu0 %v326
        %392 = vmatprep.subr.mxu0 %v329
        %393 = vmatpush1.msra.mxu0 %v328
        %394 = vmatprep.subr.mxu0 %v331
        %395 = vmatpush1.msra.mxu0 %v330
        %396 = vmatprep.subr.mxu0 %v333
        %397 = vmatpush1.msra.mxu0 %v332
        %398 = vmatprep.subr.mxu0 %v335
        %399 = vmatpush1.msra.mxu0 %v334
        %400 = vmatprep.subr.mxu0 %v337
        %401 = vmatpush1.msra.mxu0 %v336
        %402 = vmatprep.subr.mxu0 %v339
        %403 = vmatpush1.msra.mxu0 %v338
        %404 = vmatprep.subr.mxu0 %v341
        %405 = vmatpush1.msra.mxu0 %v340
        %406 = vmatprep.subr.mxu0 %v343
        %407 = vmatpush1.msra.mxu0 %v342
        %408 = vmatprep.subr.mxu0 %v345
        %409 = vmatpush1.msra.mxu0 %v344
        %410 = vmatprep.subr.mxu0 %v347
        %411 = vmatpush1.msra.mxu0 %v346
        %412 = vmatprep.subr.mxu0 %v349
        %413 = vmatpush1.msra.mxu0 %v348
        %414 = vmatprep.subr.mxu0 %v351
        %415 = vmatpush1.msra.mxu0 %v350
        %416 = vmatprep.subr.mxu0 %v353
        %417 = vmatpush1.msra.mxu0 %v352
        %418 = vmatprep.subr.mxu0 %v355
        %419 = vmatpush1.msra.mxu0 %v354
        %420 = vmatprep.subr.mxu0 %v357
        %421 = vmatpush1.msra.mxu0 %v356
        %422 = vmatprep.mubr.f32.mxu0 %v293
        %423 = vmatmul.mubr.f32.gmra.mrb[0].mxu0 %v292
        %v424 = vpop.f32.mrb[0].mxu0
        %v425 = vadd.f32 0.0, %v424
        %v426 = vpop.f32.mrb[0].mxu0
        %v427 = vadd.f32 0.0, %v426
        %428 = vdwg.mxu0
        %s429 = scalar_lea.vmem [#allocation2], 512
        %v430 = vld [vmem:[%s429] sm:$0xff]
        %v431 = vld [vmem:[%s429 + $0x8] sm:$0xff]
        %v432 = vld [vmem:[%s429 + $0x10] sm:$0xff]
        %v433 = vld [vmem:[%s429 + $0x18] sm:$0xff]
        %v434 = vld [vmem:[%s429 + $0x20] sm:$0xff]
        %v435 = vld [vmem:[%s429 + $0x28] sm:$0xff]
        %v436 = vld [vmem:[%s429 + $0x30] sm:$0xff]
        %v437 = vld [vmem:[%s429 + $0x38] sm:$0xff]
        %v438 = vld [vmem:[%s429 + $0x40] sm:$0xff]
        %v439 = vld [vmem:[%s429 + $0x48] sm:$0xff]
        %v440 = vld [vmem:[%s429 + $0x50] sm:$0xff]
        %v441 = vld [vmem:[%s429 + $0x58] sm:$0xff]
        %v442 = vld [vmem:[%s429 + $0x60] sm:$0xff]
        %v443 = vld [vmem:[%s429 + $0x68] sm:$0xff]
        %v444 = vld [vmem:[%s429 + $0x70] sm:$0xff]
        %v445 = vld [vmem:[%s429 + $0x78] sm:$0xff]
        %v446 = vld [vmem:[%s429 + $0x80] sm:$0xff]
        %v447 = vld [vmem:[%s429 + $0x88] sm:$0xff]
        %v448 = vld [vmem:[%s429 + $0x90] sm:$0xff]
        %v449 = vld [vmem:[%s429 + $0x98] sm:$0xff]
        %v450 = vld [vmem:[%s429 + $0xa0] sm:$0xff]
        %v451 = vld [vmem:[%s429 + $0xa8] sm:$0xff]
        %v452 = vld [vmem:[%s429 + $0xb0] sm:$0xff]
        %v453 = vld [vmem:[%s429 + $0xb8] sm:$0xff]
        %v454 = vld [vmem:[%s429 + $0xc0] sm:$0xff]
        %v455 = vld [vmem:[%s429 + $0xc8] sm:$0xff]
        %v456 = vld [vmem:[%s429 + $0xd0] sm:$0xff]
        %v457 = vld [vmem:[%s429 + $0xd8] sm:$0xff]
        %v458 = vld [vmem:[%s429 + $0xe0] sm:$0xff]
        %v459 = vld [vmem:[%s429 + $0xe8] sm:$0xff]
        %v460 = vld [vmem:[%s429 + $0xf0] sm:$0xff]
        %v461 = vld [vmem:[%s429 + $0xf8] sm:$0xff]
        %v462 = vld [vmem:[%s429 + $0x100] sm:$0xff]
        %v463 = vld [vmem:[%s429 + $0x108] sm:$0xff]
        %v464 = vld [vmem:[%s429 + $0x110] sm:$0xff]
        %v465 = vld [vmem:[%s429 + $0x118] sm:$0xff]
        %v466 = vld [vmem:[%s429 + $0x120] sm:$0xff]
        %v467 = vld [vmem:[%s429 + $0x128] sm:$0xff]
        %v468 = vld [vmem:[%s429 + $0x130] sm:$0xff]
        %v469 = vld [vmem:[%s429 + $0x138] sm:$0xff]
        %v470 = vld [vmem:[%s429 + $0x140] sm:$0xff]
        %v471 = vld [vmem:[%s429 + $0x148] sm:$0xff]
        %v472 = vld [vmem:[%s429 + $0x150] sm:$0xff]
        %v473 = vld [vmem:[%s429 + $0x158] sm:$0xff]
        %v474 = vld [vmem:[%s429 + $0x160] sm:$0xff]
        %v475 = vld [vmem:[%s429 + $0x168] sm:$0xff]
        %v476 = vld [vmem:[%s429 + $0x170] sm:$0xff]
        %v477 = vld [vmem:[%s429 + $0x178] sm:$0xff]
        %v478 = vld [vmem:[%s429 + $0x180] sm:$0xff]
        %v479 = vld [vmem:[%s429 + $0x188] sm:$0xff]
        %v480 = vld [vmem:[%s429 + $0x190] sm:$0xff]
        %v481 = vld [vmem:[%s429 + $0x198] sm:$0xff]
        %v482 = vld [vmem:[%s429 + $0x1a0] sm:$0xff]
        %v483 = vld [vmem:[%s429 + $0x1a8] sm:$0xff]
        %v484 = vld [vmem:[%s429 + $0x1b0] sm:$0xff]
        %v485 = vld [vmem:[%s429 + $0x1b8] sm:$0xff]
        %v486 = vld [vmem:[%s429 + $0x1c0] sm:$0xff]
        %v487 = vld [vmem:[%s429 + $0x1c8] sm:$0xff]
        %v488 = vld [vmem:[%s429 + $0x1d0] sm:$0xff]
        %v489 = vld [vmem:[%s429 + $0x1d8] sm:$0xff]
        %v490 = vld [vmem:[%s429 + $0x1e0] sm:$0xff]
        %v491 = vld [vmem:[%s429 + $0x1e8] sm:$0xff]
        %v492 = vld [vmem:[%s429 + $0x1f0] sm:$0xff]
        %v493 = vld [vmem:[%s429 + $0x1f8] sm:$0xff]
        %494 = vmatprep.subr.mxu0 %v431
        %495 = vmatpush1.msra.mxu0 %v430
        %496 = vmatprep.subr.mxu0 %v433
        %497 = vmatpush1.msra.mxu0 %v432
        %498 = vmatprep.subr.mxu0 %v435
        %499 = vmatpush1.msra.mxu0 %v434
        %500 = vmatprep.subr.mxu0 %v437
        %501 = vmatpush1.msra.mxu0 %v436
        %502 = vmatprep.subr.mxu0 %v439
        %503 = vmatpush1.msra.mxu0 %v438
        %504 = vmatprep.subr.mxu0 %v441
        %505 = vmatpush1.msra.mxu0 %v440
        %506 = vmatprep.subr.mxu0 %v443
        %507 = vmatpush1.msra.mxu0 %v442
        %508 = vmatprep.subr.mxu0 %v445
        %509 = vmatpush1.msra.mxu0 %v444
        %510 = vmatprep.subr.mxu0 %v447
        %511 = vmatpush1.msra.mxu0 %v446
        %512 = vmatprep.subr.mxu0 %v449
        %513 = vmatpush1.msra.mxu0 %v448
        %514 = vmatprep.subr.mxu0 %v451
        %515 = vmatpush1.msra.mxu0 %v450
        %516 = vmatprep.subr.mxu0 %v453
        %517 = vmatpush1.msra.mxu0 %v452
        %518 = vmatprep.subr.mxu0 %v455
        %519 = vmatpush1.msra.mxu0 %v454
        %520 = vmatprep.subr.mxu0 %v457
        %521 = vmatpush1.msra.mxu0 %v456
        %522 = vmatprep.subr.mxu0 %v459
        %523 = vmatpush1.msra.mxu0 %v458
        %524 = vmatprep.subr.mxu0 %v461
        %525 = vmatpush1.msra.mxu0 %v460
        %526 = vmatprep.subr.mxu0 %v463
        %527 = vmatpush1.msra.mxu0 %v462
        %528 = vmatprep.subr.mxu0 %v465
        %529 = vmatpush1.msra.mxu0 %v464
        %530 = vmatprep.subr.mxu0 %v467
        %531 = vmatpush1.msra.mxu0 %v466
        %532 = vmatprep.subr.mxu0 %v469
        %533 = vmatpush1.msra.mxu0 %v468
        %534 = vmatprep.subr.mxu0 %v471
        %535 = vmatpush1.msra.mxu0 %v470
        %536 = vmatprep.subr.mxu0 %v473
        %537 = vmatpush1.msra.mxu0 %v472
        %538 = vmatprep.subr.mxu0 %v475
        %539 = vmatpush1.msra.mxu0 %v474
        %540 = vmatprep.subr.mxu0 %v477
        %541 = vmatpush1.msra.mxu0 %v476
        %542 = vmatprep.subr.mxu0 %v479
        %543 = vmatpush1.msra.mxu0 %v478
        %544 = vmatprep.subr.mxu0 %v481
        %545 = vmatpush1.msra.mxu0 %v480
        %546 = vmatprep.subr.mxu0 %v483
        %547 = vmatpush1.msra.mxu0 %v482
        %548 = vmatprep.subr.mxu0 %v485
        %549 = vmatpush1.msra.mxu0 %v484
        %550 = vmatprep.subr.mxu0 %v487
        %551 = vmatpush1.msra.mxu0 %v486
        %552 = vmatprep.subr.mxu0 %v489
        %553 = vmatpush1.msra.mxu0 %v488
        %554 = vmatprep.subr.mxu0 %v491
        %555 = vmatpush1.msra.mxu0 %v490
        %556 = vmatprep.subr.mxu0 %v493
        %557 = vmatpush1.msra.mxu0 %v492
        %558 = vmatprep.mubr.f32.mxu0 %v293
        %559 = vmatmul.mubr.f32.gmra.mrb[0].mxu0 %v292
        %v560 = vpop.f32.mrb[0].mxu0
        %v561 = vadd.f32 0.0, %v560
        %v562 = vpop.f32.mrb[0].mxu0
        %v563 = vadd.f32 0.0, %v562
        %564 = vdwg.mxu0
        %s565 = scalar_lea.vmem [#allocation2], 1024
        %v566 = vld [vmem:[%s565] sm:$0xff]
        %v567 = vld [vmem:[%s565 + $0x8] sm:$0xff]
        %v568 = vld [vmem:[%s565 + $0x10] sm:$0xff]
        %v569 = vld [vmem:[%s565 + $0x18] sm:$0xff]
        %v570 = vld [vmem:[%s565 + $0x20] sm:$0xff]
        %v571 = vld [vmem:[%s565 + $0x28] sm:$0xff]
        %v572 = vld [vmem:[%s565 + $0x30] sm:$0xff]
        %v573 = vld [vmem:[%s565 + $0x38] sm:$0xff]
        %v574 = vld [vmem:[%s565 + $0x40] sm:$0xff]
        %v575 = vld [vmem:[%s565 + $0x48] sm:$0xff]
        %v576 = vld [vmem:[%s565 + $0x50] sm:$0xff]
        %v577 = vld [vmem:[%s565 + $0x58] sm:$0xff]
        %v578 = vld [vmem:[%s565 + $0x60] sm:$0xff]
        %v579 = vld [vmem:[%s565 + $0x68] sm:$0xff]
        %v580 = vld [vmem:[%s565 + $0x70] sm:$0xff]
        %v581 = vld [vmem:[%s565 + $0x78] sm:$0xff]
        %v582 = vld [vmem:[%s565 + $0x80] sm:$0xff]
        %v583 = vld [vmem:[%s565 + $0x88] sm:$0xff]
        %v584 = vld [vmem:[%s565 + $0x90] sm:$0xff]
        %v585 = vld [vmem:[%s565 + $0x98] sm:$0xff]
        %v586 = vld [vmem:[%s565 + $0xa0] sm:$0xff]
        %v587 = vld [vmem:[%s565 + $0xa8] sm:$0xff]
        %v588 = vld [vmem:[%s565 + $0xb0] sm:$0xff]
        %v589 = vld [vmem:[%s565 + $0xb8] sm:$0xff]
        %v590 = vld [vmem:[%s565 + $0xc0] sm:$0xff]
        %v591 = vld [vmem:[%s565 + $0xc8] sm:$0xff]
        %v592 = vld [vmem:[%s565 + $0xd0] sm:$0xff]
        %v593 = vld [vmem:[%s565 + $0xd8] sm:$0xff]
        %v594 = vld [vmem:[%s565 + $0xe0] sm:$0xff]
        %v595 = vld [vmem:[%s565 + $0xe8] sm:$0xff]
        %v596 = vld [vmem:[%s565 + $0xf0] sm:$0xff]
        %v597 = vld [vmem:[%s565 + $0xf8] sm:$0xff]
        %v598 = vld [vmem:[%s565 + $0x100] sm:$0xff]
        %v599 = vld [vmem:[%s565 + $0x108] sm:$0xff]
        %v600 = vld [vmem:[%s565 + $0x110] sm:$0xff]
        %v601 = vld [vmem:[%s565 + $0x118] sm:$0xff]
        %v602 = vld [vmem:[%s565 + $0x120] sm:$0xff]
        %v603 = vld [vmem:[%s565 + $0x128] sm:$0xff]
        %v604 = vld [vmem:[%s565 + $0x130] sm:$0xff]
        %v605 = vld [vmem:[%s565 + $0x138] sm:$0xff]
        %v606 = vld [vmem:[%s565 + $0x140] sm:$0xff]
        %v607 = vld [vmem:[%s565 + $0x148] sm:$0xff]
        %v608 = vld [vmem:[%s565 + $0x150] sm:$0xff]
        %v609 = vld [vmem:[%s565 + $0x158] sm:$0xff]
        %v610 = vld [vmem:[%s565 + $0x160] sm:$0xff]
        %v611 = vld [vmem:[%s565 + $0x168] sm:$0xff]
        %v612 = vld [vmem:[%s565 + $0x170] sm:$0xff]
        %v613 = vld [vmem:[%s565 + $0x178] sm:$0xff]
        %v614 = vld [vmem:[%s565 + $0x180] sm:$0xff]
        %v615 = vld [vmem:[%s565 + $0x188] sm:$0xff]
        %v616 = vld [vmem:[%s565 + $0x190] sm:$0xff]
        %v617 = vld [vmem:[%s565 + $0x198] sm:$0xff]
        %v618 = vld [vmem:[%s565 + $0x1a0] sm:$0xff]
        %v619 = vld [vmem:[%s565 + $0x1a8] sm:$0xff]
        %v620 = vld [vmem:[%s565 + $0x1b0] sm:$0xff]
        %v621 = vld [vmem:[%s565 + $0x1b8] sm:$0xff]
        %v622 = vld [vmem:[%s565 + $0x1c0] sm:$0xff]
        %v623 = vld [vmem:[%s565 + $0x1c8] sm:$0xff]
        %v624 = vld [vmem:[%s565 + $0x1d0] sm:$0xff]
        %v625 = vld [vmem:[%s565 + $0x1d8] sm:$0xff]
        %v626 = vld [vmem:[%s565 + $0x1e0] sm:$0xff]
        %v627 = vld [vmem:[%s565 + $0x1e8] sm:$0xff]
        %v628 = vld [vmem:[%s565 + $0x1f0] sm:$0xff]
        %v629 = vld [vmem:[%s565 + $0x1f8] sm:$0xff]
        %630 = vmatprep.subr.mxu0 %v567
        %631 = vmatpush1.msra.mxu0 %v566
        %632 = vmatprep.subr.mxu0 %v569
        %633 = vmatpush1.msra.mxu0 %v568
        %634 = vmatprep.subr.mxu0 %v571
        %635 = vmatpush1.msra.mxu0 %v570
        %636 = vmatprep.subr.mxu0 %v573
        %637 = vmatpush1.msra.mxu0 %v572
        %638 = vmatprep.subr.mxu0 %v575
        %639 = vmatpush1.msra.mxu0 %v574
        %640 = vmatprep.subr.mxu0 %v577
        %641 = vmatpush1.msra.mxu0 %v576
        %642 = vmatprep.subr.mxu0 %v579
        %643 = vmatpush1.msra.mxu0 %v578
        %644 = vmatprep.subr.mxu0 %v581
        %645 = vmatpush1.msra.mxu0 %v580
        %646 = vmatprep.subr.mxu0 %v583
        %647 = vmatpush1.msra.mxu0 %v582
        %648 = vmatprep.subr.mxu0 %v585
        %649 = vmatpush1.msra.mxu0 %v584
        %650 = vmatprep.subr.mxu0 %v587
        %651 = vmatpush1.msra.mxu0 %v586
        %652 = vmatprep.subr.mxu0 %v589
        %653 = vmatpush1.msra.mxu0 %v588
        %654 = vmatprep.subr.mxu0 %v591
        %655 = vmatpush1.msra.mxu0 %v590
        %656 = vmatprep.subr.mxu0 %v593
        %657 = vmatpush1.msra.mxu0 %v592
        %658 = vmatprep.subr.mxu0 %v595
        %659 = vmatpush1.msra.mxu0 %v594
        %660 = vmatprep.subr.mxu0 %v597
        %661 = vmatpush1.msra.mxu0 %v596
        %662 = vmatprep.subr.mxu0 %v599
        %663 = vmatpush1.msra.mxu0 %v598
        %664 = vmatprep.subr.mxu0 %v601
        %665 = vmatpush1.msra.mxu0 %v600
        %666 = vmatprep.subr.mxu0 %v603
        %667 = vmatpush1.msra.mxu0 %v602
        %668 = vmatprep.subr.mxu0 %v605
        %669 = vmatpush1.msra.mxu0 %v604
        %670 = vmatprep.subr.mxu0 %v607
        %671 = vmatpush1.msra.mxu0 %v606
        %672 = vmatprep.subr.mxu0 %v609
        %673 = vmatpush1.msra.mxu0 %v608
        %674 = vmatprep.subr.mxu0 %v611
        %675 = vmatpush1.msra.mxu0 %v610
        %676 = vmatprep.subr.mxu0 %v613
        %677 = vmatpush1.msra.mxu0 %v612
        %678 = vmatprep.subr.mxu0 %v615
        %679 = vmatpush1.msra.mxu0 %v614
        %680 = vmatprep.subr.mxu0 %v617
        %681 = vmatpush1.msra.mxu0 %v616
        %682 = vmatprep.subr.mxu0 %v619
        %683 = vmatpush1.msra.mxu0 %v618
        %684 = vmatprep.subr.mxu0 %v621
        %685 = vmatpush1.msra.mxu0 %v620
        %686 = vmatprep.subr.mxu0 %v623
        %687 = vmatpush1.msra.mxu0 %v622
        %688 = vmatprep.subr.mxu0 %v625
        %689 = vmatpush1.msra.mxu0 %v624
        %690 = vmatprep.subr.mxu0 %v627
        %691 = vmatpush1.msra.mxu0 %v626
        %692 = vmatprep.subr.mxu0 %v629
        %693 = vmatpush1.msra.mxu0 %v628
        %694 = vmatprep.mubr.f32.mxu0 %v293
        %695 = vmatmul.mubr.f32.gmra.mrb[0].mxu0 %v292
        %v696 = vpop.f32.mrb[0].mxu0
        %v697 = vadd.f32 0.0, %v696
        %v698 = vpop.f32.mrb[0].mxu0
        %v699 = vadd.f32 0.0, %v698
        %700 = vdwg.mxu0
        %s701 = scalar_lea.vmem [#allocation2], 1536
        %v702 = vld [vmem:[%s701] sm:$0xff]
        %v703 = vld [vmem:[%s701 + $0x8] sm:$0xff]
        %v704 = vld [vmem:[%s701 + $0x10] sm:$0xff]
        %v705 = vld [vmem:[%s701 + $0x18] sm:$0xff]
        %v706 = vld [vmem:[%s701 + $0x20] sm:$0xff]
        %v707 = vld [vmem:[%s701 + $0x28] sm:$0xff]
        %v708 = vld [vmem:[%s701 + $0x30] sm:$0xff]
        %v709 = vld [vmem:[%s701 + $0x38] sm:$0xff]
        %v710 = vld [vmem:[%s701 + $0x40] sm:$0xff]
        %v711 = vld [vmem:[%s701 + $0x48] sm:$0xff]
        %v712 = vld [vmem:[%s701 + $0x50] sm:$0xff]
        %v713 = vld [vmem:[%s701 + $0x58] sm:$0xff]
        %v714 = vld [vmem:[%s701 + $0x60] sm:$0xff]
        %v715 = vld [vmem:[%s701 + $0x68] sm:$0xff]
        %v716 = vld [vmem:[%s701 + $0x70] sm:$0xff]
        %v717 = vld [vmem:[%s701 + $0x78] sm:$0xff]
        %v718 = vld [vmem:[%s701 + $0x80] sm:$0xff]
        %v719 = vld [vmem:[%s701 + $0x88] sm:$0xff]
        %v720 = vld [vmem:[%s701 + $0x90] sm:$0xff]
        %v721 = vld [vmem:[%s701 + $0x98] sm:$0xff]
        %v722 = vld [vmem:[%s701 + $0xa0] sm:$0xff]
        %v723 = vld [vmem:[%s701 + $0xa8] sm:$0xff]
        %v724 = vld [vmem:[%s701 + $0xb0] sm:$0xff]
        %v725 = vld [vmem:[%s701 + $0xb8] sm:$0xff]
        %v726 = vld [vmem:[%s701 + $0xc0] sm:$0xff]
        %v727 = vld [vmem:[%s701 + $0xc8] sm:$0xff]
        %v728 = vld [vmem:[%s701 + $0xd0] sm:$0xff]
        %v729 = vld [vmem:[%s701 + $0xd8] sm:$0xff]
        %v730 = vld [vmem:[%s701 + $0xe0] sm:$0xff]
        %v731 = vld [vmem:[%s701 + $0xe8] sm:$0xff]
        %v732 = vld [vmem:[%s701 + $0xf0] sm:$0xff]
        %v733 = vld [vmem:[%s701 + $0xf8] sm:$0xff]
        %v734 = vld [vmem:[%s701 + $0x100] sm:$0xff]
        %v735 = vld [vmem:[%s701 + $0x108] sm:$0xff]
        %v736 = vld [vmem:[%s701 + $0x110] sm:$0xff]
        %v737 = vld [vmem:[%s701 + $0x118] sm:$0xff]
        %v738 = vld [vmem:[%s701 + $0x120] sm:$0xff]
        %v739 = vld [vmem:[%s701 + $0x128] sm:$0xff]
        %v740 = vld [vmem:[%s701 + $0x130] sm:$0xff]
        %v741 = vld [vmem:[%s701 + $0x138] sm:$0xff]
        %v742 = vld [vmem:[%s701 + $0x140] sm:$0xff]
        %v743 = vld [vmem:[%s701 + $0x148] sm:$0xff]
        %v744 = vld [vmem:[%s701 + $0x150] sm:$0xff]
        %v745 = vld [vmem:[%s701 + $0x158] sm:$0xff]
        %v746 = vld [vmem:[%s701 + $0x160] sm:$0xff]
        %v747 = vld [vmem:[%s701 + $0x168] sm:$0xff]
        %v748 = vld [vmem:[%s701 + $0x170] sm:$0xff]
        %v749 = vld [vmem:[%s701 + $0x178] sm:$0xff]
        %v750 = vld [vmem:[%s701 + $0x180] sm:$0xff]
        %v751 = vld [vmem:[%s701 + $0x188] sm:$0xff]
        %v752 = vld [vmem:[%s701 + $0x190] sm:$0xff]
        %v753 = vld [vmem:[%s701 + $0x198] sm:$0xff]
        %v754 = vld [vmem:[%s701 + $0x1a0] sm:$0xff]
        %v755 = vld [vmem:[%s701 + $0x1a8] sm:$0xff]
        %v756 = vld [vmem:[%s701 + $0x1b0] sm:$0xff]
        %v757 = vld [vmem:[%s701 + $0x1b8] sm:$0xff]
        %v758 = vld [vmem:[%s701 + $0x1c0] sm:$0xff]
        %v759 = vld [vmem:[%s701 + $0x1c8] sm:$0xff]
        %v760 = vld [vmem:[%s701 + $0x1d0] sm:$0xff]
        %v761 = vld [vmem:[%s701 + $0x1d8] sm:$0xff]
        %v762 = vld [vmem:[%s701 + $0x1e0] sm:$0xff]
        %v763 = vld [vmem:[%s701 + $0x1e8] sm:$0xff]
        %v764 = vld [vmem:[%s701 + $0x1f0] sm:$0xff]
        %v765 = vld [vmem:[%s701 + $0x1f8] sm:$0xff]
        %766 = vmatprep.subr.mxu0 %v703
        %767 = vmatpush1.msra.mxu0 %v702
        %768 = vmatprep.subr.mxu0 %v705
        %769 = vmatpush1.msra.mxu0 %v704
        %770 = vmatprep.subr.mxu0 %v707
        %771 = vmatpush1.msra.mxu0 %v706
        %772 = vmatprep.subr.mxu0 %v709
        %773 = vmatpush1.msra.mxu0 %v708
        %774 = vmatprep.subr.mxu0 %v711
        %775 = vmatpush1.msra.mxu0 %v710
        %776 = vmatprep.subr.mxu0 %v713
        %777 = vmatpush1.msra.mxu0 %v712
        %778 = vmatprep.subr.mxu0 %v715
        %779 = vmatpush1.msra.mxu0 %v714
        %780 = vmatprep.subr.mxu0 %v717
        %781 = vmatpush1.msra.mxu0 %v716
        %782 = vmatprep.subr.mxu0 %v719
        %783 = vmatpush1.msra.mxu0 %v718
        %784 = vmatprep.subr.mxu0 %v721
        %785 = vmatpush1.msra.mxu0 %v720
        %786 = vmatprep.subr.mxu0 %v723
        %787 = vmatpush1.msra.mxu0 %v722
        %788 = vmatprep.subr.mxu0 %v725
        %789 = vmatpush1.msra.mxu0 %v724
        %790 = vmatprep.subr.mxu0 %v727
        %791 = vmatpush1.msra.mxu0 %v726
        %792 = vmatprep.subr.mxu0 %v729
        %793 = vmatpush1.msra.mxu0 %v728
        %794 = vmatprep.subr.mxu0 %v731
        %795 = vmatpush1.msra.mxu0 %v730
        %796 = vmatprep.subr.mxu0 %v733
        %797 = vmatpush1.msra.mxu0 %v732
        %798 = vmatprep.subr.mxu0 %v735
        %799 = vmatpush1.msra.mxu0 %v734
        %800 = vmatprep.subr.mxu0 %v737
        %801 = vmatpush1.msra.mxu0 %v736
        %802 = vmatprep.subr.mxu0 %v739
        %803 = vmatpush1.msra.mxu0 %v738
        %804 = vmatprep.subr.mxu0 %v741
        %805 = vmatpush1.msra.mxu0 %v740
        %806 = vmatprep.subr.mxu0 %v743
        %807 = vmatpush1.msra.mxu0 %v742
        %808 = vmatprep.subr.mxu0 %v745
        %809 = vmatpush1.msra.mxu0 %v744
        %810 = vmatprep.subr.mxu0 %v747
        %811 = vmatpush1.msra.mxu0 %v746
        %812 = vmatprep.subr.mxu0 %v749
        %813 = vmatpush1.msra.mxu0 %v748
        %814 = vmatprep.subr.mxu0 %v751
        %815 = vmatpush1.msra.mxu0 %v750
        %816 = vmatprep.subr.mxu0 %v753
        %817 = vmatpush1.msra.mxu0 %v752
        %818 = vmatprep.subr.mxu0 %v755
        %819 = vmatpush1.msra.mxu0 %v754
        %820 = vmatprep.subr.mxu0 %v757
        %821 = vmatpush1.msra.mxu0 %v756
        %822 = vmatprep.subr.mxu0 %v759
        %823 = vmatpush1.msra.mxu0 %v758
        %824 = vmatprep.subr.mxu0 %v761
        %825 = vmatpush1.msra.mxu0 %v760
        %826 = vmatprep.subr.mxu0 %v763
        %827 = vmatpush1.msra.mxu0 %v762
        %828 = vmatprep.subr.mxu0 %v765
        %829 = vmatpush1.msra.mxu0 %v764
        %830 = vmatprep.mubr.f32.mxu0 %v293
        %831 = vmatmul.mubr.f32.gmra.mrb[0].mxu0 %v292
        %v832 = vpop.f32.mrb[0].mxu0
        %v833 = vadd.f32 0.0, %v832
        %v834 = vpop.f32.mrb[0].mxu0
        %v835 = vadd.f32 0.0, %v834
        %836 = vdwg.mxu0
        %s837 = scalar_lea.vmem [#allocation2], 2048
        %v838 = vld [vmem:[%s837] sm:$0xff]
        %v839 = vld [vmem:[%s837 + $0x8] sm:$0xff]
        %v840 = vld [vmem:[%s837 + $0x10] sm:$0xff]
        %v841 = vld [vmem:[%s837 + $0x18] sm:$0xff]
        %v842 = vld [vmem:[%s837 + $0x20] sm:$0xff]
        %v843 = vld [vmem:[%s837 + $0x28] sm:$0xff]
        %v844 = vld [vmem:[%s837 + $0x30] sm:$0xff]
        %v845 = vld [vmem:[%s837 + $0x38] sm:$0xff]
        %v846 = vld [vmem:[%s837 + $0x40] sm:$0xff]
        %v847 = vld [vmem:[%s837 + $0x48] sm:$0xff]
        %v848 = vld [vmem:[%s837 + $0x50] sm:$0xff]
        %v849 = vld [vmem:[%s837 + $0x58] sm:$0xff]
        %v850 = vld [vmem:[%s837 + $0x60] sm:$0xff]
        %v851 = vld [vmem:[%s837 + $0x68] sm:$0xff]
        %v852 = vld [vmem:[%s837 + $0x70] sm:$0xff]
        %v853 = vld [vmem:[%s837 + $0x78] sm:$0xff]
        %v854 = vld [vmem:[%s837 + $0x80] sm:$0xff]
        %v855 = vld [vmem:[%s837 + $0x88] sm:$0xff]
        %v856 = vld [vmem:[%s837 + $0x90] sm:$0xff]
        %v857 = vld [vmem:[%s837 + $0x98] sm:$0xff]
        %v858 = vld [vmem:[%s837 + $0xa0] sm:$0xff]
        %v859 = vld [vmem:[%s837 + $0xa8] sm:$0xff]
        %v860 = vld [vmem:[%s837 + $0xb0] sm:$0xff]
        %v861 = vld [vmem:[%s837 + $0xb8] sm:$0xff]
        %v862 = vld [vmem:[%s837 + $0xc0] sm:$0xff]
        %v863 = vld [vmem:[%s837 + $0xc8] sm:$0xff]
        %v864 = vld [vmem:[%s837 + $0xd0] sm:$0xff]
        %v865 = vld [vmem:[%s837 + $0xd8] sm:$0xff]
        %v866 = vld [vmem:[%s837 + $0xe0] sm:$0xff]
        %v867 = vld [vmem:[%s837 + $0xe8] sm:$0xff]
        %v868 = vld [vmem:[%s837 + $0xf0] sm:$0xff]
        %v869 = vld [vmem:[%s837 + $0xf8] sm:$0xff]
        %v870 = vld [vmem:[%s837 + $0x100] sm:$0xff]
        %v871 = vld [vmem:[%s837 + $0x108] sm:$0xff]
        %v872 = vld [vmem:[%s837 + $0x110] sm:$0xff]
        %v873 = vld [vmem:[%s837 + $0x118] sm:$0xff]
        %v874 = vld [vmem:[%s837 + $0x120] sm:$0xff]
        %v875 = vld [vmem:[%s837 + $0x128] sm:$0xff]
        %v876 = vld [vmem:[%s837 + $0x130] sm:$0xff]
        %v877 = vld [vmem:[%s837 + $0x138] sm:$0xff]
        %v878 = vld [vmem:[%s837 + $0x140] sm:$0xff]
        %v879 = vld [vmem:[%s837 + $0x148] sm:$0xff]
        %v880 = vld [vmem:[%s837 + $0x150] sm:$0xff]
        %v881 = vld [vmem:[%s837 + $0x158] sm:$0xff]
        %v882 = vld [vmem:[%s837 + $0x160] sm:$0xff]
        %v883 = vld [vmem:[%s837 + $0x168] sm:$0xff]
        %v884 = vld [vmem:[%s837 + $0x170] sm:$0xff]
        %v885 = vld [vmem:[%s837 + $0x178] sm:$0xff]
        %v886 = vld [vmem:[%s837 + $0x180] sm:$0xff]
        %v887 = vld [vmem:[%s837 + $0x188] sm:$0xff]
        %v888 = vld [vmem:[%s837 + $0x190] sm:$0xff]
        %v889 = vld [vmem:[%s837 + $0x198] sm:$0xff]
        %v890 = vld [vmem:[%s837 + $0x1a0] sm:$0xff]
        %v891 = vld [vmem:[%s837 + $0x1a8] sm:$0xff]
        %v892 = vld [vmem:[%s837 + $0x1b0] sm:$0xff]
        %v893 = vld [vmem:[%s837 + $0x1b8] sm:$0xff]
        %v894 = vld [vmem:[%s837 + $0x1c0] sm:$0xff]
        %v895 = vld [vmem:[%s837 + $0x1c8] sm:$0xff]
        %v896 = vld [vmem:[%s837 + $0x1d0] sm:$0xff]
        %v897 = vld [vmem:[%s837 + $0x1d8] sm:$0xff]
        %v898 = vld [vmem:[%s837 + $0x1e0] sm:$0xff]
        %v899 = vld [vmem:[%s837 + $0x1e8] sm:$0xff]
        %v900 = vld [vmem:[%s837 + $0x1f0] sm:$0xff]
        %v901 = vld [vmem:[%s837 + $0x1f8] sm:$0xff]
        %902 = vmatprep.subr.mxu0 %v839
        %903 = vmatpush1.msra.mxu0 %v838
        %904 = vmatprep.subr.mxu0 %v841
        %905 = vmatpush1.msra.mxu0 %v840
        %906 = vmatprep.subr.mxu0 %v843
        %907 = vmatpush1.msra.mxu0 %v842
        %908 = vmatprep.subr.mxu0 %v845
        %909 = vmatpush1.msra.mxu0 %v844
        %910 = vmatprep.subr.mxu0 %v847
        %911 = vmatpush1.msra.mxu0 %v846
        %912 = vmatprep.subr.mxu0 %v849
        %913 = vmatpush1.msra.mxu0 %v848
        %914 = vmatprep.subr.mxu0 %v851
        %915 = vmatpush1.msra.mxu0 %v850
        %916 = vmatprep.subr.mxu0 %v853
        %917 = vmatpush1.msra.mxu0 %v852
        %918 = vmatprep.subr.mxu0 %v855
        %919 = vmatpush1.msra.mxu0 %v854
        %920 = vmatprep.subr.mxu0 %v857
        %921 = vmatpush1.msra.mxu0 %v856
        %922 = vmatprep.subr.mxu0 %v859
        %923 = vmatpush1.msra.mxu0 %v858
        %924 = vmatprep.subr.mxu0 %v861
        %925 = vmatpush1.msra.mxu0 %v860
        %926 = vmatprep.subr.mxu0 %v863
        %927 = vmatpush1.msra.mxu0 %v862
        %928 = vmatprep.subr.mxu0 %v865
        %929 = vmatpush1.msra.mxu0 %v864
        %930 = vmatprep.subr.mxu0 %v867
        %931 = vmatpush1.msra.mxu0 %v866
        %932 = vmatprep.subr.mxu0 %v869
        %933 = vmatpush1.msra.mxu0 %v868
        %934 = vmatprep.subr.mxu0 %v871
        %935 = vmatpush1.msra.mxu0 %v870
        %936 = vmatprep.subr.mxu0 %v873
        %937 = vmatpush1.msra.mxu0 %v872
        %938 = vmatprep.subr.mxu0 %v875
        %939 = vmatpush1.msra.mxu0 %v874
        %940 = vmatprep.subr.mxu0 %v877
        %941 = vmatpush1.msra.mxu0 %v876
        %942 = vmatprep.subr.mxu0 %v879
        %943 = vmatpush1.msra.mxu0 %v878
        %944 = vmatprep.subr.mxu0 %v881
        %945 = vmatpush1.msra.mxu0 %v880
        %946 = vmatprep.subr.mxu0 %v883
        %947 = vmatpush1.msra.mxu0 %v882
        %948 = vmatprep.subr.mxu0 %v885
        %949 = vmatpush1.msra.mxu0 %v884
        %950 = vmatprep.subr.mxu0 %v887
        %951 = vmatpush1.msra.mxu0 %v886
        %952 = vmatprep.subr.mxu0 %v889
        %953 = vmatpush1.msra.mxu0 %v888
        %954 = vmatprep.subr.mxu0 %v891
        %955 = vmatpush1.msra.mxu0 %v890
        %956 = vmatprep.subr.mxu0 %v893
        %957 = vmatpush1.msra.mxu0 %v892
        %958 = vmatprep.subr.mxu0 %v895
        %959 = vmatpush1.msra.mxu0 %v894
        %960 = vmatprep.subr.mxu0 %v897
        %961 = vmatpush1.msra.mxu0 %v896
        %962 = vmatprep.subr.mxu0 %v899
        %963 = vmatpush1.msra.mxu0 %v898
        %964 = vmatprep.subr.mxu0 %v901
        %965 = vmatpush1.msra.mxu0 %v900
        %966 = vmatprep.mubr.f32.mxu0 %v293
        %967 = vmatmul.mubr.f32.gmra.mrb[0].mxu0 %v292
        %v968 = vpop.f32.mrb[0].mxu0
        %v969 = vadd.f32 0.0, %v968
        %v970 = vpop.f32.mrb[0].mxu0
        %v971 = vadd.f32 0.0, %v970
        %972 = vdwg.mxu0
        %s973 = scalar_lea.vmem [#allocation2], 2560
        %v974 = vld [vmem:[%s973] sm:$0xff]
        %v975 = vld [vmem:[%s973 + $0x8] sm:$0xff]
        %v976 = vld [vmem:[%s973 + $0x10] sm:$0xff]
        %v977 = vld [vmem:[%s973 + $0x18] sm:$0xff]
        %v978 = vld [vmem:[%s973 + $0x20] sm:$0xff]
        %v979 = vld [vmem:[%s973 + $0x28] sm:$0xff]
        %v980 = vld [vmem:[%s973 + $0x30] sm:$0xff]
        %v981 = vld [vmem:[%s973 + $0x38] sm:$0xff]
        %v982 = vld [vmem:[%s973 + $0x40] sm:$0xff]
        %v983 = vld [vmem:[%s973 + $0x48] sm:$0xff]
        %v984 = vld [vmem:[%s973 + $0x50] sm:$0xff]
        %v985 = vld [vmem:[%s973 + $0x58] sm:$0xff]
        %v986 = vld [vmem:[%s973 + $0x60] sm:$0xff]
        %v987 = vld [vmem:[%s973 + $0x68] sm:$0xff]
        %v988 = vld [vmem:[%s973 + $0x70] sm:$0xff]
        %v989 = vld [vmem:[%s973 + $0x78] sm:$0xff]
        %v990 = vld [vmem:[%s973 + $0x80] sm:$0xff]
        %v991 = vld [vmem:[%s973 + $0x88] sm:$0xff]
        %v992 = vld [vmem:[%s973 + $0x90] sm:$0xff]
        %v993 = vld [vmem:[%s973 + $0x98] sm:$0xff]
        %v994 = vld [vmem:[%s973 + $0xa0] sm:$0xff]
        %v995 = vld [vmem:[%s973 + $0xa8] sm:$0xff]
        %v996 = vld [vmem:[%s973 + $0xb0] sm:$0xff]
        %v997 = vld [vmem:[%s973 + $0xb8] sm:$0xff]
        %v998 = vld [vmem:[%s973 + $0xc0] sm:$0xff]
        %v999 = vld [vmem:[%s973 + $0xc8] sm:$0xff]
        %v1000 = vld [vmem:[%s973 + $0xd0] sm:$0xff]
        %v1001 = vld [vmem:[%s973 + $0xd8] sm:$0xff]
        %v1002 = vld [vmem:[%s973 + $0xe0] sm:$0xff]
        %v1003 = vld [vmem:[%s973 + $0xe8] sm:$0xff]
        %v1004 = vld [vmem:[%s973 + $0xf0] sm:$0xff]
        %v1005 = vld [vmem:[%s973 + $0xf8] sm:$0xff]
        %v1006 = vld [vmem:[%s973 + $0x100] sm:$0xff]
        %v1007 = vld [vmem:[%s973 + $0x108] sm:$0xff]
        %v1008 = vld [vmem:[%s973 + $0x110] sm:$0xff]
        %v1009 = vld [vmem:[%s973 + $0x118] sm:$0xff]
        %v1010 = vld [vmem:[%s973 + $0x120] sm:$0xff]
        %v1011 = vld [vmem:[%s973 + $0x128] sm:$0xff]
        %v1012 = vld [vmem:[%s973 + $0x130] sm:$0xff]
        %v1013 = vld [vmem:[%s973 + $0x138] sm:$0xff]
        %v1014 = vld [vmem:[%s973 + $0x140] sm:$0xff]
        %v1015 = vld [vmem:[%s973 + $0x148] sm:$0xff]
        %v1016 = vld [vmem:[%s973 + $0x150] sm:$0xff]
        %v1017 = vld [vmem:[%s973 + $0x158] sm:$0xff]
        %v1018 = vld [vmem:[%s973 + $0x160] sm:$0xff]
        %v1019 = vld [vmem:[%s973 + $0x168] sm:$0xff]
        %v1020 = vld [vmem:[%s973 + $0x170] sm:$0xff]
        %v1021 = vld [vmem:[%s973 + $0x178] sm:$0xff]
        %v1022 = vld [vmem:[%s973 + $0x180] sm:$0xff]
        %v1023 = vld [vmem:[%s973 + $0x188] sm:$0xff]
        %v1024 = vld [vmem:[%s973 + $0x190] sm:$0xff]
        %v1025 = vld [vmem:[%s973 + $0x198] sm:$0xff]
        %v1026 = vld [vmem:[%s973 + $0x1a0] sm:$0xff]
        %v1027 = vld [vmem:[%s973 + $0x1a8] sm:$0xff]
        %v1028 = vld [vmem:[%s973 + $0x1b0] sm:$0xff]
        %v1029 = vld [vmem:[%s973 + $0x1b8] sm:$0xff]
        %v1030 = vld [vmem:[%s973 + $0x1c0] sm:$0xff]
        %v1031 = vld [vmem:[%s973 + $0x1c8] sm:$0xff]
        %v1032 = vld [vmem:[%s973 + $0x1d0] sm:$0xff]
        %v1033 = vld [vmem:[%s973 + $0x1d8] sm:$0xff]
        %v1034 = vld [vmem:[%s973 + $0x1e0] sm:$0xff]
        %v1035 = vld [vmem:[%s973 + $0x1e8] sm:$0xff]
        %v1036 = vld [vmem:[%s973 + $0x1f0] sm:$0xff]
        %v1037 = vld [vmem:[%s973 + $0x1f8] sm:$0xff]
        %1038 = vmatprep.subr.mxu0 %v975
        %1039 = vmatpush1.msra.mxu0 %v974
        %1040 = vmatprep.subr.mxu0 %v977
        %1041 = vmatpush1.msra.mxu0 %v976
        %1042 = vmatprep.subr.mxu0 %v979
        %1043 = vmatpush1.msra.mxu0 %v978
        %1044 = vmatprep.subr.mxu0 %v981
        %1045 = vmatpush1.msra.mxu0 %v980
        %1046 = vmatprep.subr.mxu0 %v983
        %1047 = vmatpush1.msra.mxu0 %v982
        %1048 = vmatprep.subr.mxu0 %v985
        %1049 = vmatpush1.msra.mxu0 %v984
        %1050 = vmatprep.subr.mxu0 %v987
        %1051 = vmatpush1.msra.mxu0 %v986
        %1052 = vmatprep.subr.mxu0 %v989
        %1053 = vmatpush1.msra.mxu0 %v988
        %1054 = vmatprep.subr.mxu0 %v991
        %1055 = vmatpush1.msra.mxu0 %v990
        %1056 = vmatprep.subr.mxu0 %v993
        %1057 = vmatpush1.msra.mxu0 %v992
        %1058 = vmatprep.subr.mxu0 %v995
        %1059 = vmatpush1.msra.mxu0 %v994
        %1060 = vmatprep.subr.mxu0 %v997
        %1061 = vmatpush1.msra.mxu0 %v996
        %1062 = vmatprep.subr.mxu0 %v999
        %1063 = vmatpush1.msra.mxu0 %v998
        %1064 = vmatprep.subr.mxu0 %v1001
        %1065 = vmatpush1.msra.mxu0 %v1000
        %1066 = vmatprep.subr.mxu0 %v1003
        %1067 = vmatpush1.msra.mxu0 %v1002
        %1068 = vmatprep.subr.mxu0 %v1005
        %1069 = vmatpush1.msra.mxu0 %v1004
        %1070 = vmatprep.subr.mxu0 %v1007
        %1071 = vmatpush1.msra.mxu0 %v1006
        %1072 = vmatprep.subr.mxu0 %v1009
        %1073 = vmatpush1.msra.mxu0 %v1008
        %1074 = vmatprep.subr.mxu0 %v1011
        %1075 = vmatpush1.msra.mxu0 %v1010
        %1076 = vmatprep.subr.mxu0 %v1013
        %1077 = vmatpush1.msra.mxu0 %v1012
        %1078 = vmatprep.subr.mxu0 %v1015
        %1079 = vmatpush1.msra.mxu0 %v1014
        %1080 = vmatprep.subr.mxu0 %v1017
        %1081 = vmatpush1.msra.mxu0 %v1016
        %1082 = vmatprep.subr.mxu0 %v1019
        %1083 = vmatpush1.msra.mxu0 %v1018
        %1084 = vmatprep.subr.mxu0 %v1021
        %1085 = vmatpush1.msra.mxu0 %v1020
        %1086 = vmatprep.subr.mxu0 %v1023
        %1087 = vmatpush1.msra.mxu0 %v1022
        %1088 = vmatprep.subr.mxu0 %v1025
        %1089 = vmatpush1.msra.mxu0 %v1024
        %1090 = vmatprep.subr.mxu0 %v1027
        %1091 = vmatpush1.msra.mxu0 %v1026
        %1092 = vmatprep.subr.mxu0 %v1029
        %1093 = vmatpush1.msra.mxu0 %v1028
        %1094 = vmatprep.subr.mxu0 %v1031
        %1095 = vmatpush1.msra.mxu0 %v1030
        %1096 = vmatprep.subr.mxu0 %v1033
        %1097 = vmatpush1.msra.mxu0 %v1032
        %1098 = vmatprep.subr.mxu0 %v1035
        %1099 = vmatpush1.msra.mxu0 %v1034
        %1100 = vmatprep.subr.mxu0 %v1037
        %1101 = vmatpush1.msra.mxu0 %v1036
        %1102 = vmatprep.mubr.f32.mxu0 %v293
        %1103 = vmatmul.mubr.f32.gmra.mrb[0].mxu0 %v292
        %v1104 = vpop.f32.mrb[0].mxu0
        %v1105 = vadd.f32 0.0, %v1104
        %v1106 = vpop.f32.mrb[0].mxu0
        %v1107 = vadd.f32 0.0, %v1106
        %1108 = vdwg.mxu0
        %s1109 = scalar_lea.vmem [#allocation2], 3072
        %v1110 = vld [vmem:[%s1109] sm:$0xff]
        %v1111 = vld [vmem:[%s1109 + $0x8] sm:$0xff]
        %v1112 = vld [vmem:[%s1109 + $0x10] sm:$0xff]
        %v1113 = vld [vmem:[%s1109 + $0x18] sm:$0xff]
        %v1114 = vld [vmem:[%s1109 + $0x20] sm:$0xff]
        %v1115 = vld [vmem:[%s1109 + $0x28] sm:$0xff]
        %v1116 = vld [vmem:[%s1109 + $0x30] sm:$0xff]
        %v1117 = vld [vmem:[%s1109 + $0x38] sm:$0xff]
        %v1118 = vld [vmem:[%s1109 + $0x40] sm:$0xff]
        %v1119 = vld [vmem:[%s1109 + $0x48] sm:$0xff]
        %v1120 = vld [vmem:[%s1109 + $0x50] sm:$0xff]
        %v1121 = vld [vmem:[%s1109 + $0x58] sm:$0xff]
        %v1122 = vld [vmem:[%s1109 + $0x60] sm:$0xff]
        %v1123 = vld [vmem:[%s1109 + $0x68] sm:$0xff]
        %v1124 = vld [vmem:[%s1109 + $0x70] sm:$0xff]
        %v1125 = vld [vmem:[%s1109 + $0x78] sm:$0xff]
        %v1126 = vld [vmem:[%s1109 + $0x80] sm:$0xff]
        %v1127 = vld [vmem:[%s1109 + $0x88] sm:$0xff]
        %v1128 = vld [vmem:[%s1109 + $0x90] sm:$0xff]
        %v1129 = vld [vmem:[%s1109 + $0x98] sm:$0xff]
        %v1130 = vld [vmem:[%s1109 + $0xa0] sm:$0xff]
        %v1131 = vld [vmem:[%s1109 + $0xa8] sm:$0xff]
        %v1132 = vld [vmem:[%s1109 + $0xb0] sm:$0xff]
        %v1133 = vld [vmem:[%s1109 + $0xb8] sm:$0xff]
        %v1134 = vld [vmem:[%s1109 + $0xc0] sm:$0xff]
        %v1135 = vld [vmem:[%s1109 + $0xc8] sm:$0xff]
        %v1136 = vld [vmem:[%s1109 + $0xd0] sm:$0xff]
        %v1137 = vld [vmem:[%s1109 + $0xd8] sm:$0xff]
        %v1138 = vld [vmem:[%s1109 + $0xe0] sm:$0xff]
        %v1139 = vld [vmem:[%s1109 + $0xe8] sm:$0xff]
        %v1140 = vld [vmem:[%s1109 + $0xf0] sm:$0xff]
        %v1141 = vld [vmem:[%s1109 + $0xf8] sm:$0xff]
        %v1142 = vld [vmem:[%s1109 + $0x100] sm:$0xff]
        %v1143 = vld [vmem:[%s1109 + $0x108] sm:$0xff]
        %v1144 = vld [vmem:[%s1109 + $0x110] sm:$0xff]
        %v1145 = vld [vmem:[%s1109 + $0x118] sm:$0xff]
        %v1146 = vld [vmem:[%s1109 + $0x120] sm:$0xff]
        %v1147 = vld [vmem:[%s1109 + $0x128] sm:$0xff]
        %v1148 = vld [vmem:[%s1109 + $0x130] sm:$0xff]
        %v1149 = vld [vmem:[%s1109 + $0x138] sm:$0xff]
        %v1150 = vld [vmem:[%s1109 + $0x140] sm:$0xff]
        %v1151 = vld [vmem:[%s1109 + $0x148] sm:$0xff]
        %v1152 = vld [vmem:[%s1109 + $0x150] sm:$0xff]
        %v1153 = vld [vmem:[%s1109 + $0x158] sm:$0xff]
        %v1154 = vld [vmem:[%s1109 + $0x160] sm:$0xff]
        %v1155 = vld [vmem:[%s1109 + $0x168] sm:$0xff]
        %v1156 = vld [vmem:[%s1109 + $0x170] sm:$0xff]
        %v1157 = vld [vmem:[%s1109 + $0x178] sm:$0xff]
        %v1158 = vld [vmem:[%s1109 + $0x180] sm:$0xff]
        %v1159 = vld [vmem:[%s1109 + $0x188] sm:$0xff]
        %v1160 = vld [vmem:[%s1109 + $0x190] sm:$0xff]
        %v1161 = vld [vmem:[%s1109 + $0x198] sm:$0xff]
        %v1162 = vld [vmem:[%s1109 + $0x1a0] sm:$0xff]
        %v1163 = vld [vmem:[%s1109 + $0x1a8] sm:$0xff]
        %v1164 = vld [vmem:[%s1109 + $0x1b0] sm:$0xff]
        %v1165 = vld [vmem:[%s1109 + $0x1b8] sm:$0xff]
        %v1166 = vld [vmem:[%s1109 + $0x1c0] sm:$0xff]
        %v1167 = vld [vmem:[%s1109 + $0x1c8] sm:$0xff]
        %v1168 = vld [vmem:[%s1109 + $0x1d0] sm:$0xff]
        %v1169 = vld [vmem:[%s1109 + $0x1d8] sm:$0xff]
        %v1170 = vld [vmem:[%s1109 + $0x1e0] sm:$0xff]
        %v1171 = vld [vmem:[%s1109 + $0x1e8] sm:$0xff]
        %v1172 = vld [vmem:[%s1109 + $0x1f0] sm:$0xff]
        %v1173 = vld [vmem:[%s1109 + $0x1f8] sm:$0xff]
        %1174 = vmatprep.subr.mxu0 %v1111
        %1175 = vmatpush1.msra.mxu0 %v1110
        %1176 = vmatprep.subr.mxu0 %v1113
        %1177 = vmatpush1.msra.mxu0 %v1112
        %1178 = vmatprep.subr.mxu0 %v1115
        %1179 = vmatpush1.msra.mxu0 %v1114
        %1180 = vmatprep.subr.mxu0 %v1117
        %1181 = vmatpush1.msra.mxu0 %v1116
        %1182 = vmatprep.subr.mxu0 %v1119
        %1183 = vmatpush1.msra.mxu0 %v1118
        %1184 = vmatprep.subr.mxu0 %v1121
        %1185 = vmatpush1.msra.mxu0 %v1120
        %1186 = vmatprep.subr.mxu0 %v1123
        %1187 = vmatpush1.msra.mxu0 %v1122
        %1188 = vmatprep.subr.mxu0 %v1125
        %1189 = vmatpush1.msra.mxu0 %v1124
        %1190 = vmatprep.subr.mxu0 %v1127
        %1191 = vmatpush1.msra.mxu0 %v1126
        %1192 = vmatprep.subr.mxu0 %v1129
        %1193 = vmatpush1.msra.mxu0 %v1128
        %1194 = vmatprep.subr.mxu0 %v1131
        %1195 = vmatpush1.msra.mxu0 %v1130
        %1196 = vmatprep.subr.mxu0 %v1133
        %1197 = vmatpush1.msra.mxu0 %v1132
        %1198 = vmatprep.subr.mxu0 %v1135
        %1199 = vmatpush1.msra.mxu0 %v1134
        %1200 = vmatprep.subr.mxu0 %v1137
        %1201 = vmatpush1.msra.mxu0 %v1136
        %1202 = vmatprep.subr.mxu0 %v1139
        %1203 = vmatpush1.msra.mxu0 %v1138
        %1204 = vmatprep.subr.mxu0 %v1141
        %1205 = vmatpush1.msra.mxu0 %v1140
        %1206 = vmatprep.subr.mxu0 %v1143
        %1207 = vmatpush1.msra.mxu0 %v1142
        %1208 = vmatprep.subr.mxu0 %v1145
        %1209 = vmatpush1.msra.mxu0 %v1144
        %1210 = vmatprep.subr.mxu0 %v1147
        %1211 = vmatpush1.msra.mxu0 %v1146
        %1212 = vmatprep.subr.mxu0 %v1149
        %1213 = vmatpush1.msra.mxu0 %v1148
        %1214 = vmatprep.subr.mxu0 %v1151
        %1215 = vmatpush1.msra.mxu0 %v1150
        %1216 = vmatprep.subr.mxu0 %v1153
        %1217 = vmatpush1.msra.mxu0 %v1152
        %1218 = vmatprep.subr.mxu0 %v1155
        %1219 = vmatpush1.msra.mxu0 %v1154
        %1220 = vmatprep.subr.mxu0 %v1157
        %1221 = vmatpush1.msra.mxu0 %v1156
        %1222 = vmatprep.subr.mxu0 %v1159
        %1223 = vmatpush1.msra.mxu0 %v1158
        %1224 = vmatprep.subr.mxu0 %v1161
        %1225 = vmatpush1.msra.mxu0 %v1160
        %1226 = vmatprep.subr.mxu0 %v1163
        %1227 = vmatpush1.msra.mxu0 %v1162
        %1228 = vmatprep.subr.mxu0 %v1165
        %1229 = vmatpush1.msra.mxu0 %v1164
        %1230 = vmatprep.subr.mxu0 %v1167
        %1231 = vmatpush1.msra.mxu0 %v1166
        %1232 = vmatprep.subr.mxu0 %v1169
        %1233 = vmatpush1.msra.mxu0 %v1168
        %1234 = vmatprep.subr.mxu0 %v1171
        %1235 = vmatpush1.msra.mxu0 %v1170
        %1236 = vmatprep.subr.mxu0 %v1173
        %1237 = vmatpush1.msra.mxu0 %v1172
        %1238 = vmatprep.mubr.f32.mxu0 %v293
        %1239 = vmatmul.mubr.f32.gmra.mrb[0].mxu0 %v292
        %v1240 = vpop.f32.mrb[0].mxu0
        %v1241 = vadd.f32 0.0, %v1240
        %v1242 = vpop.f32.mrb[0].mxu0
        %v1243 = vadd.f32 0.0, %v1242
        %1244 = vdwg.mxu0
        %s1245 = scalar_lea.vmem [#allocation2], 3584
        %v1246 = vld [vmem:[%s1245] sm:$0xff]
        %v1247 = vld [vmem:[%s1245 + $0x8] sm:$0xff]
        %v1248 = vld [vmem:[%s1245 + $0x10] sm:$0xff]
        %v1249 = vld [vmem:[%s1245 + $0x18] sm:$0xff]
        %v1250 = vld [vmem:[%s1245 + $0x20] sm:$0xff]
        %v1251 = vld [vmem:[%s1245 + $0x28] sm:$0xff]
        %v1252 = vld [vmem:[%s1245 + $0x30] sm:$0xff]
        %v1253 = vld [vmem:[%s1245 + $0x38] sm:$0xff]
        %v1254 = vld [vmem:[%s1245 + $0x40] sm:$0xff]
        %v1255 = vld [vmem:[%s1245 + $0x48] sm:$0xff]
        %v1256 = vld [vmem:[%s1245 + $0x50] sm:$0xff]
        %v1257 = vld [vmem:[%s1245 + $0x58] sm:$0xff]
        %v1258 = vld [vmem:[%s1245 + $0x60] sm:$0xff]
        %v1259 = vld [vmem:[%s1245 + $0x68] sm:$0xff]
        %v1260 = vld [vmem:[%s1245 + $0x70] sm:$0xff]
        %v1261 = vld [vmem:[%s1245 + $0x78] sm:$0xff]
        %v1262 = vld [vmem:[%s1245 + $0x80] sm:$0xff]
        %v1263 = vld [vmem:[%s1245 + $0x88] sm:$0xff]
        %v1264 = vld [vmem:[%s1245 + $0x90] sm:$0xff]
        %v1265 = vld [vmem:[%s1245 + $0x98] sm:$0xff]
        %v1266 = vld [vmem:[%s1245 + $0xa0] sm:$0xff]
        %v1267 = vld [vmem:[%s1245 + $0xa8] sm:$0xff]
        %v1268 = vld [vmem:[%s1245 + $0xb0] sm:$0xff]
        %v1269 = vld [vmem:[%s1245 + $0xb8] sm:$0xff]
        %v1270 = vld [vmem:[%s1245 + $0xc0] sm:$0xff]
        %v1271 = vld [vmem:[%s1245 + $0xc8] sm:$0xff]
        %v1272 = vld [vmem:[%s1245 + $0xd0] sm:$0xff]
        %v1273 = vld [vmem:[%s1245 + $0xd8] sm:$0xff]
        %v1274 = vld [vmem:[%s1245 + $0xe0] sm:$0xff]
        %v1275 = vld [vmem:[%s1245 + $0xe8] sm:$0xff]
        %v1276 = vld [vmem:[%s1245 + $0xf0] sm:$0xff]
        %v1277 = vld [vmem:[%s1245 + $0xf8] sm:$0xff]
        %v1278 = vld [vmem:[%s1245 + $0x100] sm:$0xff]
        %v1279 = vld [vmem:[%s1245 + $0x108] sm:$0xff]
        %v1280 = vld [vmem:[%s1245 + $0x110] sm:$0xff]
        %v1281 = vld [vmem:[%s1245 + $0x118] sm:$0xff]
        %v1282 = vld [vmem:[%s1245 + $0x120] sm:$0xff]
        %v1283 = vld [vmem:[%s1245 + $0x128] sm:$0xff]
        %v1284 = vld [vmem:[%s1245 + $0x130] sm:$0xff]
        %v1285 = vld [vmem:[%s1245 + $0x138] sm:$0xff]
        %v1286 = vld [vmem:[%s1245 + $0x140] sm:$0xff]
        %v1287 = vld [vmem:[%s1245 + $0x148] sm:$0xff]
        %v1288 = vld [vmem:[%s1245 + $0x150] sm:$0xff]
        %v1289 = vld [vmem:[%s1245 + $0x158] sm:$0xff]
        %v1290 = vld [vmem:[%s1245 + $0x160] sm:$0xff]
        %v1291 = vld [vmem:[%s1245 + $0x168] sm:$0xff]
        %v1292 = vld [vmem:[%s1245 + $0x170] sm:$0xff]
        %v1293 = vld [vmem:[%s1245 + $0x178] sm:$0xff]
        %v1294 = vld [vmem:[%s1245 + $0x180] sm:$0xff]
        %v1295 = vld [vmem:[%s1245 + $0x188] sm:$0xff]
        %v1296 = vld [vmem:[%s1245 + $0x190] sm:$0xff]
        %v1297 = vld [vmem:[%s1245 + $0x198] sm:$0xff]
        %v1298 = vld [vmem:[%s1245 + $0x1a0] sm:$0xff]
        %v1299 = vld [vmem:[%s1245 + $0x1a8] sm:$0xff]
        %v1300 = vld [vmem:[%s1245 + $0x1b0] sm:$0xff]
        %v1301 = vld [vmem:[%s1245 + $0x1b8] sm:$0xff]
        %v1302 = vld [vmem:[%s1245 + $0x1c0] sm:$0xff]
        %v1303 = vld [vmem:[%s1245 + $0x1c8] sm:$0xff]
        %v1304 = vld [vmem:[%s1245 + $0x1d0] sm:$0xff]
        %v1305 = vld [vmem:[%s1245 + $0x1d8] sm:$0xff]
        %v1306 = vld [vmem:[%s1245 + $0x1e0] sm:$0xff]
        %v1307 = vld [vmem:[%s1245 + $0x1e8] sm:$0xff]
        %v1308 = vld [vmem:[%s1245 + $0x1f0] sm:$0xff]
        %v1309 = vld [vmem:[%s1245 + $0x1f8] sm:$0xff]
        %1310 = vmatprep.subr.mxu0 %v1247
        %1311 = vmatpush1.msra.mxu0 %v1246
        %1312 = vmatprep.subr.mxu0 %v1249
        %1313 = vmatpush1.msra.mxu0 %v1248
        %1314 = vmatprep.subr.mxu0 %v1251
        %1315 = vmatpush1.msra.mxu0 %v1250
        %1316 = vmatprep.subr.mxu0 %v1253
        %1317 = vmatpush1.msra.mxu0 %v1252
        %1318 = vmatprep.subr.mxu0 %v1255
        %1319 = vmatpush1.msra.mxu0 %v1254
        %1320 = vmatprep.subr.mxu0 %v1257
        %1321 = vmatpush1.msra.mxu0 %v1256
        %1322 = vmatprep.subr.mxu0 %v1259
        %1323 = vmatpush1.msra.mxu0 %v1258
        %1324 = vmatprep.subr.mxu0 %v1261
        %1325 = vmatpush1.msra.mxu0 %v1260
        %1326 = vmatprep.subr.mxu0 %v1263
        %1327 = vmatpush1.msra.mxu0 %v1262
        %1328 = vmatprep.subr.mxu0 %v1265
        %1329 = vmatpush1.msra.mxu0 %v1264
        %1330 = vmatprep.subr.mxu0 %v1267
        %1331 = vmatpush1.msra.mxu0 %v1266
        %1332 = vmatprep.subr.mxu0 %v1269
        %1333 = vmatpush1.msra.mxu0 %v1268
        %1334 = vmatprep.subr.mxu0 %v1271
        %1335 = vmatpush1.msra.mxu0 %v1270
        %1336 = vmatprep.subr.mxu0 %v1273
        %1337 = vmatpush1.msra.mxu0 %v1272
        %1338 = vmatprep.subr.mxu0 %v1275
        %1339 = vmatpush1.msra.mxu0 %v1274
        %1340 = vmatprep.subr.mxu0 %v1277
        %1341 = vmatpush1.msra.mxu0 %v1276
        %1342 = vmatprep.subr.mxu0 %v1279
        %1343 = vmatpush1.msra.mxu0 %v1278
        %1344 = vmatprep.subr.mxu0 %v1281
        %1345 = vmatpush1.msra.mxu0 %v1280
        %1346 = vmatprep.subr.mxu0 %v1283
        %1347 = vmatpush1.msra.mxu0 %v1282
        %1348 = vmatprep.subr.mxu0 %v1285
        %1349 = vmatpush1.msra.mxu0 %v1284
        %1350 = vmatprep.subr.mxu0 %v1287
        %1351 = vmatpush1.msra.mxu0 %v1286
        %1352 = vmatprep.subr.mxu0 %v1289
        %1353 = vmatpush1.msra.mxu0 %v1288
        %1354 = vmatprep.subr.mxu0 %v1291
        %1355 = vmatpush1.msra.mxu0 %v1290
        %1356 = vmatprep.subr.mxu0 %v1293
        %1357 = vmatpush1.msra.mxu0 %v1292
        %1358 = vmatprep.subr.mxu0 %v1295
        %1359 = vmatpush1.msra.mxu0 %v1294
        %1360 = vmatprep.subr.mxu0 %v1297
        %1361 = vmatpush1.msra.mxu0 %v1296
        %1362 = vmatprep.subr.mxu0 %v1299
        %1363 = vmatpush1.msra.mxu0 %v1298
        %1364 = vmatprep.subr.mxu0 %v1301
        %1365 = vmatpush1.msra.mxu0 %v1300
        %1366 = vmatprep.subr.mxu0 %v1303
        %1367 = vmatpush1.msra.mxu0 %v1302
        %1368 = vmatprep.subr.mxu0 %v1305
        %1369 = vmatpush1.msra.mxu0 %v1304
        %1370 = vmatprep.subr.mxu0 %v1307
        %1371 = vmatpush1.msra.mxu0 %v1306
        %1372 = vmatprep.subr.mxu0 %v1309
        %1373 = vmatpush1.msra.mxu0 %v1308
        %1374 = vmatprep.mubr.f32.mxu0 %v293
        %1375 = vmatmul.mubr.f32.gmra.mrb[0].mxu0 %v292
        %v1376 = vpop.f32.mrb[0].mxu0
        %v1377 = vadd.f32 0.0, %v1376
        %v1378 = vpop.f32.mrb[0].mxu0
        %v1379 = vadd.f32 0.0, %v1378
        %1380 = vdwg.mxu0
        %s1381 = scalar_lea.vmem [#allocation2], 4096
        %v1382 = vld [vmem:[%s1381] sm:$0xff]
        %v1383 = vld [vmem:[%s1381 + $0x8] sm:$0xff]
        %v1384 = vld [vmem:[%s1381 + $0x10] sm:$0xff]
        %v1385 = vld [vmem:[%s1381 + $0x18] sm:$0xff]
        %v1386 = vld [vmem:[%s1381 + $0x20] sm:$0xff]
        %v1387 = vld [vmem:[%s1381 + $0x28] sm:$0xff]
        %v1388 = vld [vmem:[%s1381 + $0x30] sm:$0xff]
        %v1389 = vld [vmem:[%s1381 + $0x38] sm:$0xff]
        %v1390 = vld [vmem:[%s1381 + $0x40] sm:$0xff]
        %v1391 = vld [vmem:[%s1381 + $0x48] sm:$0xff]
        %v1392 = vld [vmem:[%s1381 + $0x50] sm:$0xff]
        %v1393 = vld [vmem:[%s1381 + $0x58] sm:$0xff]
        %v1394 = vld [vmem:[%s1381 + $0x60] sm:$0xff]
        %v1395 = vld [vmem:[%s1381 + $0x68] sm:$0xff]
        %v1396 = vld [vmem:[%s1381 + $0x70] sm:$0xff]
        %v1397 = vld [vmem:[%s1381 + $0x78] sm:$0xff]
        %v1398 = vld [vmem:[%s1381 + $0x80] sm:$0xff]
        %v1399 = vld [vmem:[%s1381 + $0x88] sm:$0xff]
        %v1400 = vld [vmem:[%s1381 + $0x90] sm:$0xff]
        %v1401 = vld [vmem:[%s1381 + $0x98] sm:$0xff]
        %v1402 = vld [vmem:[%s1381 + $0xa0] sm:$0xff]
        %v1403 = vld [vmem:[%s1381 + $0xa8] sm:$0xff]
        %v1404 = vld [vmem:[%s1381 + $0xb0] sm:$0xff]
        %v1405 = vld [vmem:[%s1381 + $0xb8] sm:$0xff]
        %v1406 = vld [vmem:[%s1381 + $0xc0] sm:$0xff]
        %v1407 = vld [vmem:[%s1381 + $0xc8] sm:$0xff]
        %v1408 = vld [vmem:[%s1381 + $0xd0] sm:$0xff]
        %v1409 = vld [vmem:[%s1381 + $0xd8] sm:$0xff]
        %v1410 = vld [vmem:[%s1381 + $0xe0] sm:$0xff]
        %v1411 = vld [vmem:[%s1381 + $0xe8] sm:$0xff]
        %v1412 = vld [vmem:[%s1381 + $0xf0] sm:$0xff]
        %v1413 = vld [vmem:[%s1381 + $0xf8] sm:$0xff]
        %v1414 = vld [vmem:[%s1381 + $0x100] sm:$0xff]
        %v1415 = vld [vmem:[%s1381 + $0x108] sm:$0xff]
        %v1416 = vld [vmem:[%s1381 + $0x110] sm:$0xff]
        %v1417 = vld [vmem:[%s1381 + $0x118] sm:$0xff]
        %v1418 = vld [vmem:[%s1381 + $0x120] sm:$0xff]
        %v1419 = vld [vmem:[%s1381 + $0x128] sm:$0xff]
        %v1420 = vld [vmem:[%s1381 + $0x130] sm:$0xff]
        %v1421 = vld [vmem:[%s1381 + $0x138] sm:$0xff]
        %v1422 = vld [vmem:[%s1381 + $0x140] sm:$0xff]
        %v1423 = vld [vmem:[%s1381 + $0x148] sm:$0xff]
        %v1424 = vld [vmem:[%s1381 + $0x150] sm:$0xff]
        %v1425 = vld [vmem:[%s1381 + $0x158] sm:$0xff]
        %v1426 = vld [vmem:[%s1381 + $0x160] sm:$0xff]
        %v1427 = vld [vmem:[%s1381 + $0x168] sm:$0xff]
        %v1428 = vld [vmem:[%s1381 + $0x170] sm:$0xff]
        %v1429 = vld [vmem:[%s1381 + $0x178] sm:$0xff]
        %v1430 = vld [vmem:[%s1381 + $0x180] sm:$0xff]
        %v1431 = vld [vmem:[%s1381 + $0x188] sm:$0xff]
        %v1432 = vld [vmem:[%s1381 + $0x190] sm:$0xff]
        %v1433 = vld [vmem:[%s1381 + $0x198] sm:$0xff]
        %v1434 = vld [vmem:[%s1381 + $0x1a0] sm:$0xff]
        %v1435 = vld [vmem:[%s1381 + $0x1a8] sm:$0xff]
        %v1436 = vld [vmem:[%s1381 + $0x1b0] sm:$0xff]
        %v1437 = vld [vmem:[%s1381 + $0x1b8] sm:$0xff]
        %v1438 = vld [vmem:[%s1381 + $0x1c0] sm:$0xff]
        %v1439 = vld [vmem:[%s1381 + $0x1c8] sm:$0xff]
        %v1440 = vld [vmem:[%s1381 + $0x1d0] sm:$0xff]
        %v1441 = vld [vmem:[%s1381 + $0x1d8] sm:$0xff]
        %v1442 = vld [vmem:[%s1381 + $0x1e0] sm:$0xff]
        %v1443 = vld [vmem:[%s1381 + $0x1e8] sm:$0xff]
        %v1444 = vld [vmem:[%s1381 + $0x1f0] sm:$0xff]
        %v1445 = vld [vmem:[%s1381 + $0x1f8] sm:$0xff]
        %1446 = vmatprep.subr.mxu0 %v1383
        %1447 = vmatpush1.msra.mxu0 %v1382
        %1448 = vmatprep.subr.mxu0 %v1385
        %1449 = vmatpush1.msra.mxu0 %v1384
        %1450 = vmatprep.subr.mxu0 %v1387
        %1451 = vmatpush1.msra.mxu0 %v1386
        %1452 = vmatprep.subr.mxu0 %v1389
        %1453 = vmatpush1.msra.mxu0 %v1388
        %1454 = vmatprep.subr.mxu0 %v1391
        %1455 = vmatpush1.msra.mxu0 %v1390
        %1456 = vmatprep.subr.mxu0 %v1393
        %1457 = vmatpush1.msra.mxu0 %v1392
        %1458 = vmatprep.subr.mxu0 %v1395
        %1459 = vmatpush1.msra.mxu0 %v1394
        %1460 = vmatprep.subr.mxu0 %v1397
        %1461 = vmatpush1.msra.mxu0 %v1396
        %1462 = vmatprep.subr.mxu0 %v1399
        %1463 = vmatpush1.msra.mxu0 %v1398
        %1464 = vmatprep.subr.mxu0 %v1401
        %1465 = vmatpush1.msra.mxu0 %v1400
        %1466 = vmatprep.subr.mxu0 %v1403
        %1467 = vmatpush1.msra.mxu0 %v1402
        %1468 = vmatprep.subr.mxu0 %v1405
        %1469 = vmatpush1.msra.mxu0 %v1404
        %1470 = vmatprep.subr.mxu0 %v1407
        %1471 = vmatpush1.msra.mxu0 %v1406
        %1472 = vmatprep.subr.mxu0 %v1409
        %1473 = vmatpush1.msra.mxu0 %v1408
        %1474 = vmatprep.subr.mxu0 %v1411
        %1475 = vmatpush1.msra.mxu0 %v1410
        %1476 = vmatprep.subr.mxu0 %v1413
        %1477 = vmatpush1.msra.mxu0 %v1412
        %1478 = vmatprep.subr.mxu0 %v1415
        %1479 = vmatpush1.msra.mxu0 %v1414
        %1480 = vmatprep.subr.mxu0 %v1417
        %1481 = vmatpush1.msra.mxu0 %v1416
        %1482 = vmatprep.subr.mxu0 %v1419
        %1483 = vmatpush1.msra.mxu0 %v1418
        %1484 = vmatprep.subr.mxu0 %v1421
        %1485 = vmatpush1.msra.mxu0 %v1420
        %1486 = vmatprep.subr.mxu0 %v1423
        %1487 = vmatpush1.msra.mxu0 %v1422
        %1488 = vmatprep.subr.mxu0 %v1425
        %1489 = vmatpush1.msra.mxu0 %v1424
        %1490 = vmatprep.subr.mxu0 %v1427
        %1491 = vmatpush1.msra.mxu0 %v1426
        %1492 = vmatprep.subr.mxu0 %v1429
        %1493 = vmatpush1.msra.mxu0 %v1428
        %1494 = vmatprep.subr.mxu0 %v1431
        %1495 = vmatpush1.msra.mxu0 %v1430
        %1496 = vmatprep.subr.mxu0 %v1433
        %1497 = vmatpush1.msra.mxu0 %v1432
        %1498 = vmatprep.subr.mxu0 %v1435
        %1499 = vmatpush1.msra.mxu0 %v1434
        %1500 = vmatprep.subr.mxu0 %v1437
        %1501 = vmatpush1.msra.mxu0 %v1436
        %1502 = vmatprep.subr.mxu0 %v1439
        %1503 = vmatpush1.msra.mxu0 %v1438
        %1504 = vmatprep.subr.mxu0 %v1441
        %1505 = vmatpush1.msra.mxu0 %v1440
        %1506 = vmatprep.subr.mxu0 %v1443
        %1507 = vmatpush1.msra.mxu0 %v1442
        %1508 = vmatprep.subr.mxu0 %v1445
        %1509 = vmatpush1.msra.mxu0 %v1444
        %1510 = vmatprep.mubr.f32.mxu0 %v293
        %1511 = vmatmul.mubr.f32.gmra.mrb[0].mxu0 %v292
        %v1512 = vpop.f32.mrb[0].mxu0
        %v1513 = vadd.f32 0.0, %v1512
        %v1514 = vpop.f32.mrb[0].mxu0
        %v1515 = vadd.f32 0.0, %v1514
        %1516 = vdwg.mxu0
        %v1517 = vld [vmem:[#allocation4] sm:$0xff]
        %v1518 = vld [vmem:[%s3] sm:$0xff]
        %1520 = vset.pattern.permute.xlu0 0
        %1521 = vperm.xlu0 %1520, %v1518
        %v1522 = vpop.permute.xlu0 %1521
        %vm1524 = vcmask 588800
        %v1526 = vsel %vm1524, %v1517, 0
        %1528 = vmatprep.subr.mxu0 %v427
        %1529 = vmatpush1.msra.mxu0 %v425
        %1530 = vmatprep.subr.mxu0 %v563
        %1531 = vmatpush1.msra.mxu0 %v561
        %1532 = vmatprep.subr.mxu0 %v699
        %1533 = vmatpush1.msra.mxu0 %v697
        %1534 = vmatprep.subr.mxu0 %v835
        %1535 = vmatpush1.msra.mxu0 %v833
        %1536 = vmatprep.subr.mxu0 %v971
        %1537 = vmatpush1.msra.mxu0 %v969
        %1538 = vmatprep.subr.mxu0 %v1107
        %1539 = vmatpush1.msra.mxu0 %v1105
        %1540 = vmatprep.subr.mxu0 %v1243
        %1541 = vmatpush1.msra.mxu0 %v1241
        %1542 = vmatprep.subr.mxu0 %v1379
        %1543 = vmatpush1.msra.mxu0 %v1377
        %1544 = vmatprep.subr.mxu0 %v1515
        %1545 = vmatpush1.msra.mxu0 %v1513
        %1546 = vmatprep.subr.mxu0 0.0
        %1547 = vmatpush1.msra.mxu0 0.0
        %1548 = vmatprep.subr.mxu0 0.0
        %1549 = vmatpush1.msra.mxu0 0.0
        %1550 = vmatprep.subr.mxu0 0.0
        %1551 = vmatpush1.msra.mxu0 0.0
        %1552 = vmatprep.subr.mxu0 0.0
        %1553 = vmatpush1.msra.mxu0 0.0
        %1554 = vmatprep.subr.mxu0 0.0
        %1555 = vmatpush1.msra.mxu0 0.0
        %1556 = vmatprep.subr.mxu0 0.0
        %1557 = vmatpush1.msra.mxu0 0.0
        %1558 = vmatprep.subr.mxu0 0.0
        %1559 = vmatpush1.msra.mxu0 0.0
        %1560 = vmatprep.subr.mxu0 0.0
        %1561 = vmatpush1.msra.mxu0 0.0
        %1562 = vmatprep.subr.mxu0 0.0
        %1563 = vmatpush1.msra.mxu0 0.0
        %1564 = vmatprep.subr.mxu0 0.0
        %1565 = vmatpush1.msra.mxu0 0.0
        %1566 = vmatprep.subr.mxu0 0.0
        %1567 = vmatpush1.msra.mxu0 0.0
        %1568 = vmatprep.subr.mxu0 0.0
        %1569 = vmatpush1.msra.mxu0 0.0
        %1570 = vmatprep.subr.mxu0 0.0
        %1571 = vmatpush1.msra.mxu0 0.0
        %1572 = vmatprep.subr.mxu0 0.0
        %1573 = vmatpush1.msra.mxu0 0.0
        %1574 = vmatprep.subr.mxu0 0.0
        %1575 = vmatpush1.msra.mxu0 0.0
        %1576 = vmatprep.subr.mxu0 0.0
        %1577 = vmatpush1.msra.mxu0 0.0
        %1578 = vmatprep.subr.mxu0 0.0
        %1579 = vmatpush1.msra.mxu0 0.0
        %1580 = vmatprep.subr.mxu0 0.0
        %1581 = vmatpush1.msra.mxu0 0.0
        %1582 = vmatprep.subr.mxu0 0.0
        %1583 = vmatpush1.msra.mxu0 0.0
        %1584 = vmatprep.subr.mxu0 0.0
        %1585 = vmatpush1.msra.mxu0 0.0
        %1586 = vmatprep.subr.mxu0 0.0
        %1587 = vmatpush1.msra.mxu0 0.0
        %1588 = vmatprep.subr.mxu0 0.0
        %1589 = vmatpush1.msra.mxu0 0.0
        %1590 = vmatprep.subr.mxu0 0.0
        %1591 = vmatpush1.msra.mxu0 0.0
        %1592 = vmatprep.mubr.f32.mxu0 0.0
        %1593 = vmatmul.mubr.f32.gmra.mrb[0].mxu0 %v1526
        %v1594 = vpop.f32.mrb[0].mxu0
        %v1595 = vadd.f32 %v1522, %v1594
        %v1596 = vpop.f32.mrb[0].mxu0
        %v1597 = vadd.f32 %v1522, %v1596
        %1598 = vdwg.mxu0
        %v1599 = vadd.f32 %v1595, %v1597
        %1600 = vadd.xlane.f32.xlu0 %v1599
        %v1601 = vpop.xlane.xlu0 %1600
        %v1602 = vmul.f32 %v1601, 0.00390625
        %v1603 = vmul.f32 %v1595, %v1595
        %v1604 = vmul.f32 %v1597, %v1597
        %v1605 = vadd.f32 %v1603, %v1604
        %1606 = vadd.xlane.f32.xlu0 %v1605
        %v1607 = vpop.xlane.xlu0 %1606
        %v1608 = vmul.f32 %v1607, 0.00390625
        %v1609 = vmul.f32 %v1602, %v1602
        %v1610 = vsub.f32 %v1608, %v1609
        %v1611 = vmax.f32 %v1610, 0.0
        %v1612 = vsub.f32 %v1595, %v1602
        %v1613 = vsub.f32 %v1597, %v1602
        %v1614 = vadd.f32 %v1611, 1e-05
        %v1615 = vrsqrt.pop %v1614
        %v1616 = vmul.f32 %v1612, %v1615
        %v1617 = vmul.f32 %v1613, %v1615
        %v1618 = vmax.f32 %v1616, 0.0
        %v1619 = vmax.f32 %v1617, 0.0
        %1620 = vmatprep.subr.mxu0 %v295
        %1621 = vmatpush1.msra.mxu0 %v294
        %1622 = vmatprep.subr.mxu0 %v297
        %1623 = vmatpush1.msra.mxu0 %v296
        %1624 = vmatprep.subr.mxu0 %v299
        %1625 = vmatpush1.msra.mxu0 %v298
        %1626 = vmatprep.subr.mxu0 %v301
        %1627 = vmatpush1.msra.mxu0 %v300
        %1628 = vmatprep.subr.mxu0 %v303
        %1629 = vmatpush1.msra.mxu0 %v302
        %1630 = vmatprep.subr.mxu0 %v305
        %1631 = vmatpush1.msra.mxu0 %v304
        %1632 = vmatprep.subr.mxu0 %v307
        %1633 = vmatpush1.msra.mxu0 %v306
        %1634 = vmatprep.subr.mxu0 %v309
        %1635 = vmatpush1.msra.mxu0 %v308
        %1636 = vmatprep.subr.mxu0 %v311
        %1637 = vmatpush1.msra.mxu0 %v310
        %1638 = vmatprep.subr.mxu0 %v313
        %1639 = vmatpush1.msra.mxu0 %v312
        %1640 = vmatprep.subr.mxu0 %v315
        %1641 = vmatpush1.msra.mxu0 %v314
        %1642 = vmatprep.subr.mxu0 %v317
        %1643 = vmatpush1.msra.mxu0 %v316
        %1644 = vmatprep.subr.mxu0 %v319
        %1645 = vmatpush1.msra.mxu0 %v318
        %1646 = vmatprep.subr.mxu0 %v321
        %1647 = vmatpush1.msra.mxu0 %v320
        %1648 = vmatprep.subr.mxu0 %v323
        %1649 = vmatpush1.msra.mxu0 %v322
        %1650 = vmatprep.subr.mxu0 %v325
        %1651 = vmatpush1.msra.mxu0 %v324
        %1652 = vmatprep.subr.mxu0 %v327
        %1653 = vmatpush1.msra.mxu0 %v326
        %1654 = vmatprep.subr.mxu0 %v329
        %1655 = vmatpush1.msra.mxu0 %v328
        %1656 = vmatprep.subr.mxu0 %v331
        %1657 = vmatpush1.msra.mxu0 %v330
        %1658 = vmatprep.subr.mxu0 %v333
        %1659 = vmatpush1.msra.mxu0 %v332
        %1660 = vmatprep.subr.mxu0 %v335
        %1661 = vmatpush1.msra.mxu0 %v334
        %1662 = vmatprep.subr.mxu0 %v337
        %1663 = vmatpush1.msra.mxu0 %v336
        %1664 = vmatprep.subr.mxu0 %v339
        %1665 = vmatpush1.msra.mxu0 %v338
        %1666 = vmatprep.subr.mxu0 %v341
        %1667 = vmatpush1.msra.mxu0 %v340
        %1668 = vmatprep.subr.mxu0 %v343
        %1669 = vmatpush1.msra.mxu0 %v342
        %1670 = vmatprep.subr.mxu0 %v345
        %1671 = vmatpush1.msra.mxu0 %v344
        %1672 = vmatprep.subr.mxu0 %v347
        %1673 = vmatpush1.msra.mxu0 %v346
        %1674 = vmatprep.subr.mxu0 %v349
        %1675 = vmatpush1.msra.mxu0 %v348
        %1676 = vmatprep.subr.mxu0 %v351
        %1677 = vmatpush1.msra.mxu0 %v350
        %1678 = vmatprep.subr.mxu0 %v353
        %1679 = vmatpush1.msra.mxu0 %v352
        %1680 = vmatprep.subr.mxu0 %v355
        %1681 = vmatpush1.msra.mxu0 %v354
        %1682 = vmatprep.subr.mxu0 %v357
        %1683 = vmatpush1.msra.mxu0 %v356
        %1684 = vmatprep.mubr.f32.mxu0 %v1619
        %1685 = vmatmul.mubr.f32.gmra.mrb[0].mxu0 %v1618
        %v1686 = vpop.f32.mrb[0].mxu0
        %v1687 = vadd.f32 0.0, %v1686
        %v1688 = vpop.f32.mrb[0].mxu0
        %v1689 = vadd.f32 0.0, %v1688
        %1690 = vdwg.mxu0
        %1691 = vmatprep.subr.mxu0 %v431
        %1692 = vmatpush1.msra.mxu0 %v430
        %1693 = vmatprep.subr.mxu0 %v433
        %1694 = vmatpush1.msra.mxu0 %v432
        %1695 = vmatprep.subr.mxu0 %v435
        %1696 = vmatpush1.msra.mxu0 %v434
        %1697 = vmatprep.subr.mxu0 %v437
        %1698 = vmatpush1.msra.mxu0 %v436
        %1699 = vmatprep.subr.mxu0 %v439
        %1700 = vmatpush1.msra.mxu0 %v438
        %1701 = vmatprep.subr.mxu0 %v441
        %1702 = vmatpush1.msra.mxu0 %v440
        %1703 = vmatprep.subr.mxu0 %v443
        %1704 = vmatpush1.msra.mxu0 %v442
        %1705 = vmatprep.subr.mxu0 %v445
        %1706 = vmatpush1.msra.mxu0 %v444
        %1707 = vmatprep.subr.mxu0 %v447
        %1708 = vmatpush1.msra.mxu0 %v446
        %1709 = vmatprep.subr.mxu0 %v449
        %1710 = vmatpush1.msra.mxu0 %v448
        %1711 = vmatprep.subr.mxu0 %v451
        %1712 = vmatpush1.msra.mxu0 %v450
        %1713 = vmatprep.subr.mxu0 %v453
        %1714 = vmatpush1.msra.mxu0 %v452
        %1715 = vmatprep.subr.mxu0 %v455
        %1716 = vmatpush1.msra.mxu0 %v454
        %1717 = vmatprep.subr.mxu0 %v457
        %1718 = vmatpush1.msra.mxu0 %v456
        %1719 = vmatprep.subr.mxu0 %v459
        %1720 = vmatpush1.msra.mxu0 %v458
        %1721 = vmatprep.subr.mxu0 %v461
        %1722 = vmatpush1.msra.mxu0 %v460
        %1723 = vmatprep.subr.mxu0 %v463
        %1724 = vmatpush1.msra.mxu0 %v462
        %1725 = vmatprep.subr.mxu0 %v465
        %1726 = vmatpush1.msra.mxu0 %v464
        %1727 = vmatprep.subr.mxu0 %v467
        %1728 = vmatpush1.msra.mxu0 %v466
        %1729 = vmatprep.subr.mxu0 %v469
        %1730 = vmatpush1.msra.mxu0 %v468
        %1731 = vmatprep.subr.mxu0 %v471
        %1732 = vmatpush1.msra.mxu0 %v470
        %1733 = vmatprep.subr.mxu0 %v473
        %1734 = vmatpush1.msra.mxu0 %v472
        %1735 = vmatprep.subr.mxu0 %v475
        %1736 = vmatpush1.msra.mxu0 %v474
        %1737 = vmatprep.subr.mxu0 %v477
        %1738 = vmatpush1.msra.mxu0 %v476
        %1739 = vmatprep.subr.mxu0 %v479
        %1740 = vmatpush1.msra.mxu0 %v478
        %1741 = vmatprep.subr.mxu0 %v481
        %1742 = vmatpush1.msra.mxu0 %v480
        %1743 = vmatprep.subr.mxu0 %v483
        %1744 = vmatpush1.msra.mxu0 %v482
        %1745 = vmatprep.subr.mxu0 %v485
        %1746 = vmatpush1.msra.mxu0 %v484
        %1747 = vmatprep.subr.mxu0 %v487
        %1748 = vmatpush1.msra.mxu0 %v486
        %1749 = vmatprep.subr.mxu0 %v489
        %1750 = vmatpush1.msra.mxu0 %v488
        %1751 = vmatprep.subr.mxu0 %v491
        %1752 = vmatpush1.msra.mxu0 %v490
        %1753 = vmatprep.subr.mxu0 %v493
        %1754 = vmatpush1.msra.mxu0 %v492
        %1755 = vmatprep.mubr.f32.mxu0 %v1619
        %1756 = vmatmul.mubr.f32.gmra.mrb[0].mxu0 %v1618
        %v1757 = vpop.f32.mrb[0].mxu0
        %v1758 = vadd.f32 0.0, %v1757
        %v1759 = vpop.f32.mrb[0].mxu0
        %v1760 = vadd.f32 0.0, %v1759
        %1761 = vdwg.mxu0
        %1762 = vmatprep.subr.mxu0 %v567
        %1763 = vmatpush1.msra.mxu0 %v566
        %1764 = vmatprep.subr.mxu0 %v569
        %1765 = vmatpush1.msra.mxu0 %v568
        %1766 = vmatprep.subr.mxu0 %v571
        %1767 = vmatpush1.msra.mxu0 %v570
        %1768 = vmatprep.subr.mxu0 %v573
        %1769 = vmatpush1.msra.mxu0 %v572
        %1770 = vmatprep.subr.mxu0 %v575
        %1771 = vmatpush1.msra.mxu0 %v574
        %1772 = vmatprep.subr.mxu0 %v577
        %1773 = vmatpush1.msra.mxu0 %v576
        %1774 = vmatprep.subr.mxu0 %v579
        %1775 = vmatpush1.msra.mxu0 %v578
        %1776 = vmatprep.subr.mxu0 %v581
        %1777 = vmatpush1.msra.mxu0 %v580
        %1778 = vmatprep.subr.mxu0 %v583
        %1779 = vmatpush1.msra.mxu0 %v582
        %1780 = vmatprep.subr.mxu0 %v585
        %1781 = vmatpush1.msra.mxu0 %v584
        %1782 = vmatprep.subr.mxu0 %v587
        %1783 = vmatpush1.msra.mxu0 %v586
        %1784 = vmatprep.subr.mxu0 %v589
        %1785 = vmatpush1.msra.mxu0 %v588
        %1786 = vmatprep.subr.mxu0 %v591
        %1787 = vmatpush1.msra.mxu0 %v590
        %1788 = vmatprep.subr.mxu0 %v593
        %1789 = vmatpush1.msra.mxu0 %v592
        %1790 = vmatprep.subr.mxu0 %v595
        %1791 = vmatpush1.msra.mxu0 %v594
        %1792 = vmatprep.subr.mxu0 %v597
        %1793 = vmatpush1.msra.mxu0 %v596
        %1794 = vmatprep.subr.mxu0 %v599
        %1795 = vmatpush1.msra.mxu0 %v598
        %1796 = vmatprep.subr.mxu0 %v601
        %1797 = vmatpush1.msra.mxu0 %v600
        %1798 = vmatprep.subr.mxu0 %v603
        %1799 = vmatpush1.msra.mxu0 %v602
        %1800 = vmatprep.subr.mxu0 %v605
        %1801 = vmatpush1.msra.mxu0 %v604
        %1802 = vmatprep.subr.mxu0 %v607
        %1803 = vmatpush1.msra.mxu0 %v606
        %1804 = vmatprep.subr.mxu0 %v609
        %1805 = vmatpush1.msra.mxu0 %v608
        %1806 = vmatprep.subr.mxu0 %v611
        %1807 = vmatpush1.msra.mxu0 %v610
        %1808 = vmatprep.subr.mxu0 %v613
        %1809 = vmatpush1.msra.mxu0 %v612
        %1810 = vmatprep.subr.mxu0 %v615
        %1811 = vmatpush1.msra.mxu0 %v614
        %1812 = vmatprep.subr.mxu0 %v617
        %1813 = vmatpush1.msra.mxu0 %v616
        %1814 = vmatprep.subr.mxu0 %v619
        %1815 = vmatpush1.msra.mxu0 %v618
        %1816 = vmatprep.subr.mxu0 %v621
        %1817 = vmatpush1.msra.mxu0 %v620
        %1818 = vmatprep.subr.mxu0 %v623
        %1819 = vmatpush1.msra.mxu0 %v622
        %1820 = vmatprep.subr.mxu0 %v625
        %1821 = vmatpush1.msra.mxu0 %v624
        %1822 = vmatprep.subr.mxu0 %v627
        %1823 = vmatpush1.msra.mxu0 %v626
        %1824 = vmatprep.subr.mxu0 %v629
        %1825 = vmatpush1.msra.mxu0 %v628
        %1826 = vmatprep.mubr.f32.mxu0 %v1619
        %1827 = vmatmul.mubr.f32.gmra.mrb[0].mxu0 %v1618
        %v1828 = vpop.f32.mrb[0].mxu0
        %v1829 = vadd.f32 0.0, %v1828
        %v1830 = vpop.f32.mrb[0].mxu0
        %v1831 = vadd.f32 0.0, %v1830
        %1832 = vdwg.mxu0
        %1833 = vmatprep.subr.mxu0 %v703
        %1834 = vmatpush1.msra.mxu0 %v702
        %1835 = vmatprep.subr.mxu0 %v705
        %1836 = vmatpush1.msra.mxu0 %v704
        %1837 = vmatprep.subr.mxu0 %v707
        %1838 = vmatpush1.msra.mxu0 %v706
        %1839 = vmatprep.subr.mxu0 %v709
        %1840 = vmatpush1.msra.mxu0 %v708
        %1841 = vmatprep.subr.mxu0 %v711
        %1842 = vmatpush1.msra.mxu0 %v710
        %1843 = vmatprep.subr.mxu0 %v713
        %1844 = vmatpush1.msra.mxu0 %v712
        %1845 = vmatprep.subr.mxu0 %v715
        %1846 = vmatpush1.msra.mxu0 %v714
        %1847 = vmatprep.subr.mxu0 %v717
        %1848 = vmatpush1.msra.mxu0 %v716
        %1849 = vmatprep.subr.mxu0 %v719
        %1850 = vmatpush1.msra.mxu0 %v718
        %1851 = vmatprep.subr.mxu0 %v721
        %1852 = vmatpush1.msra.mxu0 %v720
        %1853 = vmatprep.subr.mxu0 %v723
        %1854 = vmatpush1.msra.mxu0 %v722
        %1855 = vmatprep.subr.mxu0 %v725
        %1856 = vmatpush1.msra.mxu0 %v724
        %1857 = vmatprep.subr.mxu0 %v727
        %1858 = vmatpush1.msra.mxu0 %v726
        %1859 = vmatprep.subr.mxu0 %v729
        %1860 = vmatpush1.msra.mxu0 %v728
        %1861 = vmatprep.subr.mxu0 %v731
        %1862 = vmatpush1.msra.mxu0 %v730
        %1863 = vmatprep.subr.mxu0 %v733
        %1864 = vmatpush1.msra.mxu0 %v732
        %1865 = vmatprep.subr.mxu0 %v735
        %1866 = vmatpush1.msra.mxu0 %v734
        %1867 = vmatprep.subr.mxu0 %v737
        %1868 = vmatpush1.msra.mxu0 %v736
        %1869 = vmatprep.subr.mxu0 %v739
        %1870 = vmatpush1.msra.mxu0 %v738
        %1871 = vmatprep.subr.mxu0 %v741
        %1872 = vmatpush1.msra.mxu0 %v740
        %1873 = vmatprep.subr.mxu0 %v743
        %1874 = vmatpush1.msra.mxu0 %v742
        %1875 = vmatprep.subr.mxu0 %v745
        %1876 = vmatpush1.msra.mxu0 %v744
        %1877 = vmatprep.subr.mxu0 %v747
        %1878 = vmatpush1.msra.mxu0 %v746
        %1879 = vmatprep.subr.mxu0 %v749
        %1880 = vmatpush1.msra.mxu0 %v748
        %1881 = vmatprep.subr.mxu0 %v751
        %1882 = vmatpush1.msra.mxu0 %v750
        %1883 = vmatprep.subr.mxu0 %v753
        %1884 = vmatpush1.msra.mxu0 %v752
        %1885 = vmatprep.subr.mxu0 %v755
        %1886 = vmatpush1.msra.mxu0 %v754
        %1887 = vmatprep.subr.mxu0 %v757
        %1888 = vmatpush1.msra.mxu0 %v756
        %1889 = vmatprep.subr.mxu0 %v759
        %1890 = vmatpush1.msra.mxu0 %v758
        %1891 = vmatprep.subr.mxu0 %v761
        %1892 = vmatpush1.msra.mxu0 %v760
        %1893 = vmatprep.subr.mxu0 %v763
        %1894 = vmatpush1.msra.mxu0 %v762
        %1895 = vmatprep.subr.mxu0 %v765
        %1896 = vmatpush1.msra.mxu0 %v764
        %1897 = vmatprep.mubr.f32.mxu0 %v1619
        %1898 = vmatmul.mubr.f32.gmra.mrb[0].mxu0 %v1618
        %v1899 = vpop.f32.mrb[0].mxu0
        %v1900 = vadd.f32 0.0, %v1899
        %v1901 = vpop.f32.mrb[0].mxu0
        %v1902 = vadd.f32 0.0, %v1901
        %1903 = vdwg.mxu0
        %1904 = vmatprep.subr.mxu0 %v839
        %1905 = vmatpush1.msra.mxu0 %v838
        %1906 = vmatprep.subr.mxu0 %v841
        %1907 = vmatpush1.msra.mxu0 %v840
        %1908 = vmatprep.subr.mxu0 %v843
        %1909 = vmatpush1.msra.mxu0 %v842
        %1910 = vmatprep.subr.mxu0 %v845
        %1911 = vmatpush1.msra.mxu0 %v844
        %1912 = vmatprep.subr.mxu0 %v847
        %1913 = vmatpush1.msra.mxu0 %v846
        %1914 = vmatprep.subr.mxu0 %v849
        %1915 = vmatpush1.msra.mxu0 %v848
        %1916 = vmatprep.subr.mxu0 %v851
        %1917 = vmatpush1.msra.mxu0 %v850
        %1918 = vmatprep.subr.mxu0 %v853
        %1919 = vmatpush1.msra.mxu0 %v852
        %1920 = vmatprep.subr.mxu0 %v855
        %1921 = vmatpush1.msra.mxu0 %v854
        %1922 = vmatprep.subr.mxu0 %v857
        %1923 = vmatpush1.msra.mxu0 %v856
        %1924 = vmatprep.subr.mxu0 %v859
        %1925 = vmatpush1.msra.mxu0 %v858
        %1926 = vmatprep.subr.mxu0 %v861
        %1927 = vmatpush1.msra.mxu0 %v860
        %1928 = vmatprep.subr.mxu0 %v863
        %1929 = vmatpush1.msra.mxu0 %v862
        %1930 = vmatprep.subr.mxu0 %v865
        %1931 = vmatpush1.msra.mxu0 %v864
        %1932 = vmatprep.subr.mxu0 %v867
        %1933 = vmatpush1.msra.mxu0 %v866
        %1934 = vmatprep.subr.mxu0 %v869
        %1935 = vmatpush1.msra.mxu0 %v868
        %1936 = vmatprep.subr.mxu0 %v871
        %1937 = vmatpush1.msra.mxu0 %v870
        %1938 = vmatprep.subr.mxu0 %v873
        %1939 = vmatpush1.msra.mxu0 %v872
        %1940 = vmatprep.subr.mxu0 %v875
        %1941 = vmatpush1.msra.mxu0 %v874
        %1942 = vmatprep.subr.mxu0 %v877
        %1943 = vmatpush1.msra.mxu0 %v876
        %1944 = vmatprep.subr.mxu0 %v879
        %1945 = vmatpush1.msra.mxu0 %v878
        %1946 = vmatprep.subr.mxu0 %v881
        %1947 = vmatpush1.msra.mxu0 %v880
        %1948 = vmatprep.subr.mxu0 %v883
        %1949 = vmatpush1.msra.mxu0 %v882
        %1950 = vmatprep.subr.mxu0 %v885
        %1951 = vmatpush1.msra.mxu0 %v884
        %1952 = vmatprep.subr.mxu0 %v887
        %1953 = vmatpush1.msra.mxu0 %v886
        %1954 = vmatprep.subr.mxu0 %v889
        %1955 = vmatpush1.msra.mxu0 %v888
        %1956 = vmatprep.subr.mxu0 %v891
        %1957 = vmatpush1.msra.mxu0 %v890
        %1958 = vmatprep.subr.mxu0 %v893
        %1959 = vmatpush1.msra.mxu0 %v892
        %1960 = vmatprep.subr.mxu0 %v895
        %1961 = vmatpush1.msra.mxu0 %v894
        %1962 = vmatprep.subr.mxu0 %v897
        %1963 = vmatpush1.msra.mxu0 %v896
        %1964 = vmatprep.subr.mxu0 %v899
        %1965 = vmatpush1.msra.mxu0 %v898
        %1966 = vmatprep.subr.mxu0 %v901
        %1967 = vmatpush1.msra.mxu0 %v900
        %1968 = vmatprep.mubr.f32.mxu0 %v1619
        %1969 = vmatmul.mubr.f32.gmra.mrb[0].mxu0 %v1618
        %v1970 = vpop.f32.mrb[0].mxu0
        %v1971 = vadd.f32 0.0, %v1970
        %v1972 = vpop.f32.mrb[0].mxu0
        %v1973 = vadd.f32 0.0, %v1972
        %1974 = vdwg.mxu0
        %1975 = vmatprep.subr.mxu0 %v975
        %1976 = vmatpush1.msra.mxu0 %v974
        %1977 = vmatprep.subr.mxu0 %v977
        %1978 = vmatpush1.msra.mxu0 %v976
        %1979 = vmatprep.subr.mxu0 %v979
        %1980 = vmatpush1.msra.mxu0 %v978
        %1981 = vmatprep.subr.mxu0 %v981
        %1982 = vmatpush1.msra.mxu0 %v980
        %1983 = vmatprep.subr.mxu0 %v983
        %1984 = vmatpush1.msra.mxu0 %v982
        %1985 = vmatprep.subr.mxu0 %v985
        %1986 = vmatpush1.msra.mxu0 %v984
        %1987 = vmatprep.subr.mxu0 %v987
        %1988 = vmatpush1.msra.mxu0 %v986
        %1989 = vmatprep.subr.mxu0 %v989
        %1990 = vmatpush1.msra.mxu0 %v988
        %1991 = vmatprep.subr.mxu0 %v991
        %1992 = vmatpush1.msra.mxu0 %v990
        %1993 = vmatprep.subr.mxu0 %v993
        %1994 = vmatpush1.msra.mxu0 %v992
        %1995 = vmatprep.subr.mxu0 %v995
        %1996 = vmatpush1.msra.mxu0 %v994
        %1997 = vmatprep.subr.mxu0 %v997
        %1998 = vmatpush1.msra.mxu0 %v996
        %1999 = vmatprep.subr.mxu0 %v999
        %2000 = vmatpush1.msra.mxu0 %v998
        %2001 = vmatprep.subr.mxu0 %v1001
        %2002 = vmatpush1.msra.mxu0 %v1000
        %2003 = vmatprep.subr.mxu0 %v1003
        %2004 = vmatpush1.msra.mxu0 %v1002
        %2005 = vmatprep.subr.mxu0 %v1005
        %2006 = vmatpush1.msra.mxu0 %v1004
        %2007 = vmatprep.subr.mxu0 %v1007
        %2008 = vmatpush1.msra.mxu0 %v1006
        %2009 = vmatprep.subr.mxu0 %v1009
        %2010 = vmatpush1.msra.mxu0 %v1008
        %2011 = vmatprep.subr.mxu0 %v1011
        %2012 = vmatpush1.msra.mxu0 %v1010
        %2013 = vmatprep.subr.mxu0 %v1013
        %2014 = vmatpush1.msra.mxu0 %v1012
        %2015 = vmatprep.subr.mxu0 %v1015
        %2016 = vmatpush1.msra.mxu0 %v1014
        %2017 = vmatprep.subr.mxu0 %v1017
        %2018 = vmatpush1.msra.mxu0 %v1016
        %2019 = vmatprep.subr.mxu0 %v1019
        %2020 = vmatpush1.msra.mxu0 %v1018
        %2021 = vmatprep.subr.mxu0 %v1021
        %2022 = vmatpush1.msra.mxu0 %v1020
        %2023 = vmatprep.subr.mxu0 %v1023
        %2024 = vmatpush1.msra.mxu0 %v1022
        %2025 = vmatprep.subr.mxu0 %v1025
        %2026 = vmatpush1.msra.mxu0 %v1024
        %2027 = vmatprep.subr.mxu0 %v1027
        %2028 = vmatpush1.msra.mxu0 %v1026
        %2029 = vmatprep.subr.mxu0 %v1029
        %2030 = vmatpush1.msra.mxu0 %v1028
        %2031 = vmatprep.subr.mxu0 %v1031
        %2032 = vmatpush1.msra.mxu0 %v1030
        %2033 = vmatprep.subr.mxu0 %v1033
        %2034 = vmatpush1.msra.mxu0 %v1032
        %2035 = vmatprep.subr.mxu0 %v1035
        %2036 = vmatpush1.msra.mxu0 %v1034
        %2037 = vmatprep.subr.mxu0 %v1037
        %2038 = vmatpush1.msra.mxu0 %v1036
        %2039 = vmatprep.mubr.f32.mxu0 %v1619
        %2040 = vmatmul.mubr.f32.gmra.mrb[0].mxu0 %v1618
        %v2041 = vpop.f32.mrb[0].mxu0
        %v2042 = vadd.f32 0.0, %v2041
        %v2043 = vpop.f32.mrb[0].mxu0
        %v2044 = vadd.f32 0.0, %v2043
        %2045 = vdwg.mxu0
        %2046 = vmatprep.subr.mxu0 %v1111
        %2047 = vmatpush1.msra.mxu0 %v1110
        %2048 = vmatprep.subr.mxu0 %v1113
        %2049 = vmatpush1.msra.mxu0 %v1112
        %2050 = vmatprep.subr.mxu0 %v1115
        %2051 = vmatpush1.msra.mxu0 %v1114
        %2052 = vmatprep.subr.mxu0 %v1117
        %2053 = vmatpush1.msra.mxu0 %v1116
        %2054 = vmatprep.subr.mxu0 %v1119
        %2055 = vmatpush1.msra.mxu0 %v1118
        %2056 = vmatprep.subr.mxu0 %v1121
        %2057 = vmatpush1.msra.mxu0 %v1120
        %2058 = vmatprep.subr.mxu0 %v1123
        %2059 = vmatpush1.msra.mxu0 %v1122
        %2060 = vmatprep.subr.mxu0 %v1125
        %2061 = vmatpush1.msra.mxu0 %v1124
        %2062 = vmatprep.subr.mxu0 %v1127
        %2063 = vmatpush1.msra.mxu0 %v1126
        %2064 = vmatprep.subr.mxu0 %v1129
        %2065 = vmatpush1.msra.mxu0 %v1128
        %2066 = vmatprep.subr.mxu0 %v1131
        %2067 = vmatpush1.msra.mxu0 %v1130
        %2068 = vmatprep.subr.mxu0 %v1133
        %2069 = vmatpush1.msra.mxu0 %v1132
        %2070 = vmatprep.subr.mxu0 %v1135
        %2071 = vmatpush1.msra.mxu0 %v1134
        %2072 = vmatprep.subr.mxu0 %v1137
        %2073 = vmatpush1.msra.mxu0 %v1136
        %2074 = vmatprep.subr.mxu0 %v1139
        %2075 = vmatpush1.msra.mxu0 %v1138
        %2076 = vmatprep.subr.mxu0 %v1141
        %2077 = vmatpush1.msra.mxu0 %v1140
        %2078 = vmatprep.subr.mxu0 %v1143
        %2079 = vmatpush1.msra.mxu0 %v1142
        %2080 = vmatprep.subr.mxu0 %v1145
        %2081 = vmatpush1.msra.mxu0 %v1144
        %2082 = vmatprep.subr.mxu0 %v1147
        %2083 = vmatpush1.msra.mxu0 %v1146
        %2084 = vmatprep.subr.mxu0 %v1149
        %2085 = vmatpush1.msra.mxu0 %v1148
        %2086 = vmatprep.subr.mxu0 %v1151
        %2087 = vmatpush1.msra.mxu0 %v1150
        %2088 = vmatprep.subr.mxu0 %v1153
        %2089 = vmatpush1.msra.mxu0 %v1152
        %2090 = vmatprep.subr.mxu0 %v1155
        %2091 = vmatpush1.msra.mxu0 %v1154
        %2092 = vmatprep.subr.mxu0 %v1157
        %2093 = vmatpush1.msra.mxu0 %v1156
        %2094 = vmatprep.subr.mxu0 %v1159
        %2095 = vmatpush1.msra.mxu0 %v1158
        %2096 = vmatprep.subr.mxu0 %v1161
        %2097 = vmatpush1.msra.mxu0 %v1160
        %2098 = vmatprep.subr.mxu0 %v1163
        %2099 = vmatpush1.msra.mxu0 %v1162
        %2100 = vmatprep.subr.mxu0 %v1165
        %2101 = vmatpush1.msra.mxu0 %v1164
        %2102 = vmatprep.subr.mxu0 %v1167
        %2103 = vmatpush1.msra.mxu0 %v1166
        %2104 = vmatprep.subr.mxu0 %v1169
        %2105 = vmatpush1.msra.mxu0 %v1168
        %2106 = vmatprep.subr.mxu0 %v1171
        %2107 = vmatpush1.msra.mxu0 %v1170
        %2108 = vmatprep.subr.mxu0 %v1173
        %2109 = vmatpush1.msra.mxu0 %v1172
        %2110 = vmatprep.mubr.f32.mxu0 %v1619
        %2111 = vmatmul.mubr.f32.gmra.mrb[0].mxu0 %v1618
        %v2112 = vpop.f32.mrb[0].mxu0
        %v2113 = vadd.f32 0.0, %v2112
        %v2114 = vpop.f32.mrb[0].mxu0
        %v2115 = vadd.f32 0.0, %v2114
        %2116 = vdwg.mxu0
        %2117 = vmatprep.subr.mxu0 %v1247
        %2118 = vmatpush1.msra.mxu0 %v1246
        %2119 = vmatprep.subr.mxu0 %v1249
        %2120 = vmatpush1.msra.mxu0 %v1248
        %2121 = vmatprep.subr.mxu0 %v1251
        %2122 = vmatpush1.msra.mxu0 %v1250
        %2123 = vmatprep.subr.mxu0 %v1253
        %2124 = vmatpush1.msra.mxu0 %v1252
        %2125 = vmatprep.subr.mxu0 %v1255
        %2126 = vmatpush1.msra.mxu0 %v1254
        %2127 = vmatprep.subr.mxu0 %v1257
        %2128 = vmatpush1.msra.mxu0 %v1256
        %2129 = vmatprep.subr.mxu0 %v1259
        %2130 = vmatpush1.msra.mxu0 %v1258
        %2131 = vmatprep.subr.mxu0 %v1261
        %2132 = vmatpush1.msra.mxu0 %v1260
        %2133 = vmatprep.subr.mxu0 %v1263
        %2134 = vmatpush1.msra.mxu0 %v1262
        %2135 = vmatprep.subr.mxu0 %v1265
        %2136 = vmatpush1.msra.mxu0 %v1264
        %2137 = vmatprep.subr.mxu0 %v1267
        %2138 = vmatpush1.msra.mxu0 %v1266
        %2139 = vmatprep.subr.mxu0 %v1269
        %2140 = vmatpush1.msra.mxu0 %v1268
        %2141 = vmatprep.subr.mxu0 %v1271
        %2142 = vmatpush1.msra.mxu0 %v1270
        %2143 = vmatprep.subr.mxu0 %v1273
        %2144 = vmatpush1.msra.mxu0 %v1272
        %2145 = vmatprep.subr.mxu0 %v1275
        %2146 = vmatpush1.msra.mxu0 %v1274
        %2147 = vmatprep.subr.mxu0 %v1277
        %2148 = vmatpush1.msra.mxu0 %v1276
        %2149 = vmatprep.subr.mxu0 %v1279
        %2150 = vmatpush1.msra.mxu0 %v1278
        %2151 = vmatprep.subr.mxu0 %v1281
        %2152 = vmatpush1.msra.mxu0 %v1280
        %2153 = vmatprep.subr.mxu0 %v1283
        %2154 = vmatpush1.msra.mxu0 %v1282
        %2155 = vmatprep.subr.mxu0 %v1285
        %2156 = vmatpush1.msra.mxu0 %v1284
        %2157 = vmatprep.subr.mxu0 %v1287
        %2158 = vmatpush1.msra.mxu0 %v1286
        %2159 = vmatprep.subr.mxu0 %v1289
        %2160 = vmatpush1.msra.mxu0 %v1288
        %2161 = vmatprep.subr.mxu0 %v1291
        %2162 = vmatpush1.msra.mxu0 %v1290
        %2163 = vmatprep.subr.mxu0 %v1293
        %2164 = vmatpush1.msra.mxu0 %v1292
        %2165 = vmatprep.subr.mxu0 %v1295
        %2166 = vmatpush1.msra.mxu0 %v1294
        %2167 = vmatprep.subr.mxu0 %v1297
        %2168 = vmatpush1.msra.mxu0 %v1296
        %2169 = vmatprep.subr.mxu0 %v1299
        %2170 = vmatpush1.msra.mxu0 %v1298
        %2171 = vmatprep.subr.mxu0 %v1301
        %2172 = vmatpush1.msra.mxu0 %v1300
        %2173 = vmatprep.subr.mxu0 %v1303
        %2174 = vmatpush1.msra.mxu0 %v1302
        %2175 = vmatprep.subr.mxu0 %v1305
        %2176 = vmatpush1.msra.mxu0 %v1304
        %2177 = vmatprep.subr.mxu0 %v1307
        %2178 = vmatpush1.msra.mxu0 %v1306
        %2179 = vmatprep.subr.mxu0 %v1309
        %2180 = vmatpush1.msra.mxu0 %v1308
        %2181 = vmatprep.mubr.f32.mxu0 %v1619
        %2182 = vmatmul.mubr.f32.gmra.mrb[0].mxu0 %v1618
        %v2183 = vpop.f32.mrb[0].mxu0
        %v2184 = vadd.f32 0.0, %v2183
        %v2185 = vpop.f32.mrb[0].mxu0
        %v2186 = vadd.f32 0.0, %v2185
        %2187 = vdwg.mxu0
        %2188 = vmatprep.subr.mxu0 %v1383
        %2189 = vmatpush1.msra.mxu0 %v1382
        %2190 = vmatprep.subr.mxu0 %v1385
        %2191 = vmatpush1.msra.mxu0 %v1384
        %2192 = vmatprep.subr.mxu0 %v1387
        %2193 = vmatpush1.msra.mxu0 %v1386
        %2194 = vmatprep.subr.mxu0 %v1389
        %2195 = vmatpush1.msra.mxu0 %v1388
        %2196 = vmatprep.subr.mxu0 %v1391
        %2197 = vmatpush1.msra.mxu0 %v1390
        %2198 = vmatprep.subr.mxu0 %v1393
        %2199 = vmatpush1.msra.mxu0 %v1392
        %2200 = vmatprep.subr.mxu0 %v1395
        %2201 = vmatpush1.msra.mxu0 %v1394
        %2202 = vmatprep.subr.mxu0 %v1397
        %2203 = vmatpush1.msra.mxu0 %v1396
        %2204 = vmatprep.subr.mxu0 %v1399
        %2205 = vmatpush1.msra.mxu0 %v1398
        %2206 = vmatprep.subr.mxu0 %v1401
        %2207 = vmatpush1.msra.mxu0 %v1400
        %2208 = vmatprep.subr.mxu0 %v1403
        %2209 = vmatpush1.msra.mxu0 %v1402
        %2210 = vmatprep.subr.mxu0 %v1405
        %2211 = vmatpush1.msra.mxu0 %v1404
        %2212 = vmatprep.subr.mxu0 %v1407
        %2213 = vmatpush1.msra.mxu0 %v1406
        %2214 = vmatprep.subr.mxu0 %v1409
        %2215 = vmatpush1.msra.mxu0 %v1408
        %2216 = vmatprep.subr.mxu0 %v1411
        %2217 = vmatpush1.msra.mxu0 %v1410
        %2218 = vmatprep.subr.mxu0 %v1413
        %2219 = vmatpush1.msra.mxu0 %v1412
        %2220 = vmatprep.subr.mxu0 %v1415
        %2221 = vmatpush1.msra.mxu0 %v1414
        %2222 = vmatprep.subr.mxu0 %v1417
        %2223 = vmatpush1.msra.mxu0 %v1416
        %2224 = vmatprep.subr.mxu0 %v1419
        %2225 = vmatpush1.msra.mxu0 %v1418
        %2226 = vmatprep.subr.mxu0 %v1421
        %2227 = vmatpush1.msra.mxu0 %v1420
        %2228 = vmatprep.subr.mxu0 %v1423
        %2229 = vmatpush1.msra.mxu0 %v1422
        %2230 = vmatprep.subr.mxu0 %v1425
        %2231 = vmatpush1.msra.mxu0 %v1424
        %2232 = vmatprep.subr.mxu0 %v1427
        %2233 = vmatpush1.msra.mxu0 %v1426
        %2234 = vmatprep.subr.mxu0 %v1429
        %2235 = vmatpush1.msra.mxu0 %v1428
        %2236 = vmatprep.subr.mxu0 %v1431
        %2237 = vmatpush1.msra.mxu0 %v1430
        %2238 = vmatprep.subr.mxu0 %v1433
        %2239 = vmatpush1.msra.mxu0 %v1432
        %2240 = vmatprep.subr.mxu0 %v1435
        %2241 = vmatpush1.msra.mxu0 %v1434
        %2242 = vmatprep.subr.mxu0 %v1437
        %2243 = vmatpush1.msra.mxu0 %v1436
        %2244 = vmatprep.subr.mxu0 %v1439
        %2245 = vmatpush1.msra.mxu0 %v1438
        %2246 = vmatprep.subr.mxu0 %v1441
        %2247 = vmatpush1.msra.mxu0 %v1440
        %2248 = vmatprep.subr.mxu0 %v1443
        %2249 = vmatpush1.msra.mxu0 %v1442
        %2250 = vmatprep.subr.mxu0 %v1445
        %2251 = vmatpush1.msra.mxu0 %v1444
        %2252 = vmatprep.mubr.f32.mxu0 %v1619
        %2253 = vmatmul.mubr.f32.gmra.mrb[0].mxu0 %v1618
        %v2254 = vpop.f32.mrb[0].mxu0
        %v2255 = vadd.f32 0.0, %v2254
        %v2256 = vpop.f32.mrb[0].mxu0
        %v2257 = vadd.f32 0.0, %v2256
        %2258 = vdwg.mxu0
        %v2259 = vld [vmem:[#allocation6] sm:$0xff]
        %v2260 = vld [vmem:[%s5] sm:$0xff]
        %2262 = vset.pattern.permute.xlu0 0
        %2263 = vperm.xlu0 %2262, %v2260
        %v2264 = vpop.permute.xlu0 %2263
        %v2267 = vsel %vm1524, %v2259, 0
        %2269 = vmatprep.subr.mxu0 %v1689
        %2270 = vmatpush1.msra.mxu0 %v1687
        %2271 = vmatprep.subr.mxu0 %v1760
        %2272 = vmatpush1.msra.mxu0 %v1758
        %2273 = vmatprep.subr.mxu0 %v1831
        %2274 = vmatpush1.msra.mxu0 %v1829
        %2275 = vmatprep.subr.mxu0 %v1902
        %2276 = vmatpush1.msra.mxu0 %v1900
        %2277 = vmatprep.subr.mxu0 %v1973
        %2278 = vmatpush1.msra.mxu0 %v1971
        %2279 = vmatprep.subr.mxu0 %v2044
        %2280 = vmatpush1.msra.mxu0 %v2042
        %2281 = vmatprep.subr.mxu0 %v2115
        %2282 = vmatpush1.msra.mxu0 %v2113
        %2283 = vmatprep.subr.mxu0 %v2186
        %2284 = vmatpush1.msra.mxu0 %v2184
        %2285 = vmatprep.subr.mxu0 %v2257
        %2286 = vmatpush1.msra.mxu0 %v2255
        %2287 = vmatprep.subr.mxu0 0.0
        %2288 = vmatpush1.msra.mxu0 0.0
        %2289 = vmatprep.subr.mxu0 0.0
        %2290 = vmatpush1.msra.mxu0 0.0
        %2291 = vmatprep.subr.mxu0 0.0
        %2292 = vmatpush1.msra.mxu0 0.0
        %2293 = vmatprep.subr.mxu0 0.0
        %2294 = vmatpush1.msra.mxu0 0.0
        %2295 = vmatprep.subr.mxu0 0.0
        %2296 = vmatpush1.msra.mxu0 0.0
        %2297 = vmatprep.subr.mxu0 0.0
        %2298 = vmatpush1.msra.mxu0 0.0
        %2299 = vmatprep.subr.mxu0 0.0
        %2300 = vmatpush1.msra.mxu0 0.0
        %2301 = vmatprep.subr.mxu0 0.0
        %2302 = vmatpush1.msra.mxu0 0.0
        %2303 = vmatprep.subr.mxu0 0.0
        %2304 = vmatpush1.msra.mxu0 0.0
        %2305 = vmatprep.subr.mxu0 0.0
        %2306 = vmatpush1.msra.mxu0 0.0
        %2307 = vmatprep.subr.mxu0 0.0
        %2308 = vmatpush1.msra.mxu0 0.0
        %2309 = vmatprep.subr.mxu0 0.0
        %2310 = vmatpush1.msra.mxu0 0.0
        %2311 = vmatprep.subr.mxu0 0.0
        %2312 = vmatpush1.msra.mxu0 0.0
        %2313 = vmatprep.subr.mxu0 0.0
        %2314 = vmatpush1.msra.mxu0 0.0
        %2315 = vmatprep.subr.mxu0 0.0
        %2316 = vmatpush1.msra.mxu0 0.0
        %2317 = vmatprep.subr.mxu0 0.0
        %2318 = vmatpush1.msra.mxu0 0.0
        %2319 = vmatprep.subr.mxu0 0.0
        %2320 = vmatpush1.msra.mxu0 0.0
        %2321 = vmatprep.subr.mxu0 0.0
        %2322 = vmatpush1.msra.mxu0 0.0
        %2323 = vmatprep.subr.mxu0 0.0
        %2324 = vmatpush1.msra.mxu0 0.0
        %2325 = vmatprep.subr.mxu0 0.0
        %2326 = vmatpush1.msra.mxu0 0.0
        %2327 = vmatprep.subr.mxu0 0.0
        %2328 = vmatpush1.msra.mxu0 0.0
        %2329 = vmatprep.subr.mxu0 0.0
        %2330 = vmatpush1.msra.mxu0 0.0
        %2331 = vmatprep.subr.mxu0 0.0
        %2332 = vmatpush1.msra.mxu0 0.0
        %2333 = vmatprep.mubr.f32.mxu0 0.0
        %2334 = vmatmul.mubr.f32.gmra.mrb[0].mxu0 %v2267
        %v2335 = vpop.f32.mrb[0].mxu0
        %v2336 = vadd.f32 %v2264, %v2335
        %v2337 = vpop.f32.mrb[0].mxu0
        %v2338 = vadd.f32 %v2264, %v2337
        %2339 = vdwg.mxu0
        %v2340 = vadd.f32 %v2336, %v2338
        %2341 = vadd.xlane.f32.xlu0 %v2340
        %v2342 = vpop.xlane.xlu0 %2341
        %v2343 = vmul.f32 %v2342, 0.00390625
        %v2344 = vmul.f32 %v2336, %v2336
        %v2345 = vmul.f32 %v2338, %v2338
        %v2346 = vadd.f32 %v2344, %v2345
        %2347 = vadd.xlane.f32.xlu0 %v2346
        %v2348 = vpop.xlane.xlu0 %2347
        %v2349 = vmul.f32 %v2348, 0.00390625
        %v2350 = vmul.f32 %v2343, %v2343
        %v2351 = vsub.f32 %v2349, %v2350
        %v2352 = vmax.f32 %v2351, 0.0
        %v2353 = vsub.f32 %v2336, %v2343
        %v2354 = vsub.f32 %v2338, %v2343
        %v2355 = vadd.f32 %v2352, 1e-05
        %v2356 = vrsqrt.pop %v2355
        %v2357 = vmul.f32 %v2353, %v2356
        %v2358 = vmul.f32 %v2354, %v2356
        %v2359 = vadd.f32 %v292, %v2357
        %v2360 = vadd.f32 %v293, %v2358
        %2361 = vst [vmem:[%s291] sm:$0xff] %v2359
        %2362 = vst [vmem:[%s291 + $0x8] sm:$0xff] %v2360
        %p2363 = scmp.lt.s32.totalorder %s19, 1
        %s2364 = scalar_select %p2363, %s19, 1
        %s2365 = smul.addr %s2364, 2
        %s2366 = smul.addr %s2365, 8
        %s2367 = scalar_lea.vmem %s6, %s2366
        // Predicated region
        $region57: #{resnet_block_forward.1} parent=43 // pred_check
          %p2368 = pneg %p168
        $region58: #{resnet_block_forward.1} parent=43 // pred_check_branch
          %2370 = sbr.rel (%p2368) target = $region60
        $region59: #{resnet_block_forward.1} parent=43 // pred_region
          _
        $region60: #{resnet_block_forward.1} parent=43 // pred_fallthru
          _
      $region44: #{resnet_block_forward.1} parent=5 // pred_fallthru
        _
      %p2371 = scmp.le.s32.totalorder 2, %s14
      // Predicated region
      $region61: #{resnet_block_forward.1} parent=5 // pred_check
        %p2372 = pneg %p2371
      $region62: #{resnet_block_forward.1} parent=5 // pred_check_branch
        %2374 = sbr.rel (%p2372) target = $region64
      $region63: #{resnet_block_forward.1} parent=5 // pred_region
        %s2375 = ssub.s32 %s14, 2
        // Predicated region
        $region65: #{resnet_block_forward.1} parent=63 // pred_check
          %p2376 = pneg %p174
        $region66: #{resnet_block_forward.1} parent=63 // pred_check_branch
          %2378 = sbr.rel (%p2376) target = $region68
        $region67: #{resnet_block_forward.1} parent=63 // pred_region
          %p2379 = scmp.lt.s32.totalorder %s20, 1
          %s2380 = scalar_select %p2379, %s20, 1
          %s2381 = smul.addr %s2380, 2
          %s2382 = smul.addr %s2381, 8
          %s2383 = scalar_lea.vmem %s6, %s2382
        $region68: #{resnet_block_forward.1} parent=63 // pred_fallthru
          _
      $region64: #{resnet_block_forward.1} parent=5 // pred_fallthru
        _
    $region6: #{resnet_block_forward.1} parent=1 // loop_footer
      %s18 = sadd.s32 1, %s14
    $region7: #{resnet_block_forward.1} parent=1 // loop_footer_branch
      %13 = sbr.rel target = $region3
    $region8: #{resnet_block_forward.1} parent=1 // loop_exit
      _
    %2384 = vsyncpa [#allocation3], 1
    %s2385 = scalar_lea.sflag [#allocation3], 1
    %2386 = vsyncpa %s2385, 1
    %2387 = vsyncpa [#allocation5], 1

</llo_original>
